<compile_context>
chip_gen: v6e
topology: v6e:2x2x1
jax: 0.10.0
libtpu: 0.0.40
codegen_flags: <defaults>
</compile_context>

<pallas_src>
import functools

import jax
import jax.numpy as jnp
from jax.experimental import pallas as pl
from jax.experimental.pallas import tpu as pltpu


def _round_up(x, m):
    return ((x + m - 1) // m) * m


def _ghost_kernel(patch_ref, w1_ref, w2_ref, b2_ref, x1_ref, x2_ref, x1pad_ref,
                  *, K, dilation, padding, T, Wo, Cmid_p, WL, Wt):
    # patch_ref : (1, Th, Wo, Cp)   im2col patches (+ ones lane) for this row
    #                               tile, Th = T + 2*padding rows incl. halo
    # w1_ref    : (Cp, Cmid_p)      [w1 taps ; b1 ; zero-pad] -> matmul gives x1
    #                               incl. bias; exact 0 for out-of-frame rows
    # w2_ref    : (K*K, 1, Cmid_p)  depthwise taps
    # b2_ref    : (1, Cmid_p)
    # x1_ref    : (1, T, Wo, Cmid_p)  normal-conv output rows (lane dense)
    # x2_ref    : (1, T, Wo, Cmid_p)  cheap-conv output rows  (lane dense)
    # x1pad_ref : VMEM (Th, Wt, Cmid_p) f32 scratch; interior starts at WL
    #             (multiple of 8) so the big store is a dense vst.
    Th = T + 2 * padding
    Cp = w1_ref.shape[0]

    # ---- normal conv: single im2col MXU matmul, f32 accumulation ------------
    lhs = patch_ref[0].reshape(Th * Wo, Cp)
    x1f = jnp.dot(lhs, w1_ref[...], preferred_element_type=jnp.float32)
    # Down-cast once: this is both what is stored and what the cheap conv
    # consumes (parity with the PyTorch module, which feeds the stored x1).
    x1c = x1f.reshape(Th, Wo, Cmid_p).astype(x1_ref.dtype)
    x1_ref[0] = x1c[padding:padding + T]

    # ---- cheap conv: depthwise Cmid -> Cmid, stride=1 ------------------------
    # Zero the aligned W borders every step ("parallel" axes may be split across
    # TensorCores, each with its own scratch), then one dense interior store.
    if WL > 0:
        x1pad_ref[:, :WL, :] = jnp.zeros((Th, WL, Cmid_p), jnp.float32)
    if Wt - WL - Wo > 0:
        x1pad_ref[:, WL + Wo:, :] = jnp.zeros((Th, Wt - WL - Wo, Cmid_p),
                                              jnp.float32)
    x1pad_ref[:, WL:WL + Wo, :] = x1c.astype(jnp.float32)

    w2 = w2_ref[...].astype(jnp.float32)                    # load all taps once
    acc = jnp.broadcast_to(b2_ref[...].astype(jnp.float32), (T, Wo, Cmid_p))
    for kh in range(K):
        h0 = kh * dilation
        for kw in range(K):
            w0 = WL - padding + kw * dilation
            tap = x1pad_ref[h0:h0 + T, w0:w0 + Wo, :]       # ref slice -> vld
            acc = acc + tap * w2[kh * K + kw]
    x2_ref[0] = acc.astype(x2_ref.dtype)


def ghost_conv2d(x_nchw, w1, b1, w2, b2, *, stride=1, padding=0, dilation=1,
                 tile_ho=8):
    """GhostNet ghost-conv forward.

    x_nchw: (N, Cin, H, W);  w1: (Cmid, Cin, K, K);  b1: (Cmid,);
    w2: (Cmid, 1, K, K);     b2: (Cmid,).  Returns (N, 2*Cmid, Ho, Wo) in NCHW.
    """
    N, Cin, H, W = x_nchw.shape
    Cmid, Cin_w, K, K2 = w1.shape
    assert Cin_w == Cin and K == K2
    # The torch module only concats cleanly when the cheap conv preserves the
    # spatial size (e.g. K=3, padding=1, dilation=1).
    assert 2 * padding == dilation * (K - 1), \
        "cheap-conv output must match normal-conv output"

    Ho = (H + 2 * padding - dilation * (K - 1) - 1) // stride + 1
    Wo = (W + 2 * padding - dilation * (K - 1) - 1) // stride + 1

    LANE = 128
    Cmid_p = _round_up(Cmid, LANE)
    Kc = K * K * Cin
    Cp = _round_up(Kc + 1, LANE)            # +1: constant lane carrying b1
    # TODO(synk): for K*K*Cin >> 128 switch to a per-tap (tap-paired) matmul
    # path; im2col replicates the input K*K times in HBM at large Cin.

    T = max(1, min(tile_ho, Ho))            # output rows per grid step
    n_tiles = pl.cdiv(Ho, T)
    Ho_pad = n_tiles * T
    Th = T + 2 * padding                    # rows incl. depthwise halo
    WL = _round_up(padding, 8)              # aligned left pad of the scratch
    Wt = WL + _round_up(Wo + padding, 8)    # scratch width (>= WL + Wo + padding)

    # ---- im2col in XLA (stride / dilation / NCHW->NHWC handled here) --------
    x = jnp.transpose(x_nchw, (0, 2, 3, 1))                        # NHWC
    x_sp = jnp.pad(x, ((0, 0), (padding, padding), (padding, padding), (0, 0)))
    taps = []
    for kh in range(K):
        for kw in range(K):
            taps.append(
                x_sp[:,
                     kh * dilation: kh * dilation + (Ho - 1) * stride + 1: stride,
                     kw * dilation: kw * dilation + (Wo - 1) * stride + 1: stride,
                     :])
    ones = jnp.ones((N, Ho, Wo, 1), x.dtype)   # bias lane; marks in-frame rows
    patches = jnp.concatenate(taps + [ones], axis=-1)              # (N,Ho,Wo,Kc+1)
    patches = jnp.pad(patches, ((0, 0), (0, 0), (0, 0), (0, Cp - (Kc + 1))))
    # Row-tile + halo: out-of-frame halo rows are all-zero (incl. the ones
    # lane), so the in-kernel matmul yields exactly 0 there == the depthwise
    # zero padding of x1.  Overlapping haloed tiles are materialised here.
    patches = jnp.pad(patches, ((0, 0), (padding, Ho_pad - Ho + padding),
                                (0, 0), (0, 0)))
    patches_t = jnp.concatenate(
        [patches[:, j * T: j * T + Th][:, None] for j in range(n_tiles)], axis=1)
    patches_t = patches_t.reshape(N * n_tiles, Th, Wo, Cp)

    # ---- weight / bias re-layout ---------------------------------------------
    w1_t = jnp.transpose(w1, (2, 3, 1, 0)).reshape(Kc, Cmid)
    w1_b = jnp.concatenate([w1_t, b1.astype(w1.dtype).reshape(1, Cmid)], axis=0)
    w1_p = jnp.pad(w1_b, ((0, Cp - (Kc + 1)), (0, Cmid_p - Cmid)))
    w2_t = jnp.transpose(w2[:, 0, :, :], (1, 2, 0)).reshape(K * K, 1, Cmid)
    w2_p = jnp.pad(w2_t, ((0, 0), (0, 0), (0, Cmid_p - Cmid)))
    b2_p = jnp.pad(b2, (0, Cmid_p - Cmid)).reshape(1, Cmid_p)

    kernel = functools.partial(
        _ghost_kernel, K=K, dilation=dilation, padding=padding, T=T, Wo=Wo,
        Cmid_p=Cmid_p, WL=WL, Wt=Wt)

    itemsize = jnp.dtype(x.dtype).itemsize
    flops = (2 * N * n_tiles * Th * Wo * Cp * Cmid_p            # im2col matmul
             + 2 * N * Ho_pad * Wo * K * K * Cmid_p)            # depthwise
    bytes_accessed = itemsize * (patches_t.size + w1_p.size + w2_p.size
                                 + b2_p.size + 2 * N * Ho_pad * Wo * Cmid_p)

    x1o, x2o = pl.pallas_call(
        kernel,
        out_shape=(jax.ShapeDtypeStruct((N, Ho_pad, Wo, Cmid_p), x.dtype),
                   jax.ShapeDtypeStruct((N, Ho_pad, Wo, Cmid_p), x.dtype)),
        grid_spec=pltpu.PrefetchScalarGridSpec(
            num_scalar_prefetch=0,
            grid=(N, n_tiles),
            in_specs=[
                pl.BlockSpec((1, Th, Wo, Cp),
                             lambda n, j: (n * n_tiles + j, 0, 0, 0)),
                # Constant-index weight operands (small here; on VMEM-tight
                # parts these could additionally use pipeline_mode=Buffered(1)).
                pl.BlockSpec((Cp, Cmid_p), lambda n, j: (0, 0)),
                pl.BlockSpec((K * K, 1, Cmid_p), lambda n, j: (0, 0, 0)),
                pl.BlockSpec((1, Cmid_p), lambda n, j: (0, 0)),
            ],
            out_specs=[
                pl.BlockSpec((1, T, Wo, Cmid_p), lambda n, j: (n, j, 0, 0)),
                pl.BlockSpec((1, T, Wo, Cmid_p), lambda n, j: (n, j, 0, 0)),
            ],
            scratch_shapes=[pltpu.VMEM((Th, Wt, Cmid_p), jnp.float32)],
        ),
        compiler_params=pltpu.CompilerParams(
            dimension_semantics=("parallel", "parallel"),
            vmem_limit_bytes=64 * 1024 * 1024),
        cost_estimate=pl.CostEstimate(flops=flops, transcendentals=0,
                                      bytes_accessed=bytes_accessed),
    )(patches_t, w1_p, w2_p, b2_p)

    # drop row / channel padding, concat [normal | cheap], back to NCHW
    out_nhwc = jnp.concatenate([x1o[:, :Ho, :, :Cmid], x2o[:, :Ho, :, :Cmid]],
                               axis=-1)
    return jnp.transpose(out_nhwc, (0, 3, 1, 2))


def _reference(x, w1, b1, w2, b2, stride, padding, dilation):
    """Pure-JAX NCHW reference mirroring the PyTorch module."""
    dn = ("NCHW", "OIHW", "NCHW")
    pads = [(padding, padding), (padding, padding)]
    x1 = jax.lax.conv_general_dilated(
        x, w1, (stride, stride), pads, rhs_dilation=(dilation, dilation),
        dimension_numbers=dn, precision=jax.lax.Precision.HIGHEST)
    x1 = x1 + b1[None, :, None, None]
    x2 = jax.lax.conv_general_dilated(
        x1, w2, (1, 1), pads, rhs_dilation=(dilation, dilation),
        dimension_numbers=dn, feature_group_count=w2.shape[0],
        precision=jax.lax.Precision.HIGHEST)
    x2 = x2 + b2[None, :, None, None]
    return jnp.concatenate([x1, x2], axis=1)


if __name__ == "__main__":
    # Module hyper-parameters (small, consistent with _GhostConv2d)
    N, Cin, H, W = 2, 4, 16, 16
    Cout, K, stride, padding, dilation = 8, 3, 1, 1, 1
    Cmid = Cout // 2

    key = jax.random.PRNGKey(0)
    k1, k2, k3, k4, k5 = jax.random.split(key, 5)
    # normal_conv: Conv2d(Cin, Cmid, K)  -> weight (Cmid, Cin, K, K), bias (Cmid,)
    w1 = jax.random.normal(k1, (Cmid, Cin, K, K), jnp.float32) * 0.1
    b1 = jax.random.normal(k2, (Cmid,), jnp.float32) * 0.1
    # cheap_conv: Conv2d(Cmid, Cmid, K, groups=Cmid) -> weight (Cmid, 1, K, K)
    w2 = jax.random.normal(k3, (Cmid, 1, K, K), jnp.float32) * 0.1
    b2 = jax.random.normal(k4, (Cmid,), jnp.float32) * 0.1

    x = jax.random.normal(k5, (N, Cin, H, W), jnp.float32)

    # tile_ho=8 -> two row tiles per image: exercises the halo/row-tiling path.
    out = ghost_conv2d(x, w1, b1, w2, b2,
                       stride=stride, padding=padding, dilation=dilation,
                       tile_ho=8)
    out = jax.block_until_ready(out)

    ref = _reference(x, w1, b1, w2, b2, stride, padding, dilation)
    assert out.shape == ref.shape == (N, Cout, H, W), (out.shape, ref.shape)
    assert jnp.allclose(out, ref, rtol=1e-3, atol=1e-2), \
        float(jnp.max(jnp.abs(out - ref)))

    print("KERNEL_OK")
</pallas_src>

<mosaic_0001>
module attributes {stable_mosaic.version = 11 : i64} {
  func.func @_ghost_kernel(%arg0: i32, %arg1: i32, %arg2: memref<1x10x16x128xf32, #tpu.memory_space<vmem>>, %arg3: memref<128x128xf32, #tpu.memory_space<vmem>>, %arg4: memref<9x1x128xf32, #tpu.memory_space<vmem>>, %arg5: memref<1x128xf32, #tpu.memory_space<vmem>>, %arg6: memref<1x8x16x128xf32, #tpu.memory_space<vmem>>, %arg7: memref<1x8x16x128xf32, #tpu.memory_space<vmem>>, %arg8: memref<10x32x128xf32, #tpu.memory_space<vmem>>) attributes {dimension_semantics = [#tpu.dimension_semantics<parallel>, #tpu.dimension_semantics<parallel>], iteration_bounds = array<i64: 2, 2>, scalar_prefetch = 0 : i64, scratch_operands = 1 : i64, tpu.core_type = #tpu.core_type<tc>, window_params = [{transform_indices = @transform_0, window_bounds = array<i64: 1, 10, 16, 128>}, {pipeline_mode = #tpu.pipeline_mode<synchronous>, transform_indices = @transform_1, window_bounds = array<i64: 128, 128>}, {pipeline_mode = #tpu.pipeline_mode<synchronous>, transform_indices = @transform_2, window_bounds = array<i64: 9, 1, 128>}, {pipeline_mode = #tpu.pipeline_mode<synchronous>, transform_indices = @transform_3, window_bounds = array<i64: 1, 128>}, {transform_indices = @transform_4, window_bounds = array<i64: 1, 8, 16, 128>}, {transform_indices = @transform_5, window_bounds = array<i64: 1, 8, 16, 128>}]} {
    %c0 = arith.constant 0 : index
    %c0_0 = arith.constant 0 : index
    %c0_1 = arith.constant 0 : index
    %c0_2 = arith.constant 0 : index
    %0 = vector.load %arg2[%c0, %c0_0, %c0_1, %c0_2] : memref<1x10x16x128xf32, #tpu.memory_space<vmem>>, vector<1x10x16x128xf32>
    %1 = vector.shape_cast %0 : vector<1x10x16x128xf32> to vector<10x16x128xf32>
    %2 = vector.shape_cast %1 : vector<10x16x128xf32> to vector<160x128xf32>
    %c0_3 = arith.constant 0 : index
    %c0_4 = arith.constant 0 : index
    %3 = vector.load %arg3[%c0_3, %c0_4] : memref<128x128xf32, #tpu.memory_space<vmem>>, vector<128x128xf32>
    %cst = arith.constant dense<0.000000e+00> : vector<160x128xf32>
    %4 = tpu.matmul %2, %3, %cst {dimension_numbers = #tpu.dot_dimension_numbers<[1], [0], [0], [1], [0, 0, 1, 1], [], []>} : vector<160x128xf32>, vector<128x128xf32>, vector<160x128xf32> -> vector<160x128xf32>
    %5 = vector.shape_cast %4 : vector<160x128xf32> to vector<10x16x128xf32>
    %6 = vector.extract_strided_slice %5 {offsets = [1, 0, 0], sizes = [8, 16, 128], strides = [1, 1, 1]} : vector<10x16x128xf32> to vector<8x16x128xf32>
    %c0_5 = arith.constant 0 : index
    %c0_6 = arith.constant 0 : index
    %c0_7 = arith.constant 0 : index
    %c0_8 = arith.constant 0 : index
    %7 = vector.load %arg6[%c0_5, %c0_6, %c0_7, %c0_8] : memref<1x8x16x128xf32, #tpu.memory_space<vmem>>, vector<1x8x16x128xf32>
    %8 = vector.shape_cast %7 : vector<1x8x16x128xf32> to vector<8x16x128xf32>
    %9 = vector.shape_cast %6 : vector<8x16x128xf32> to vector<1x8x16x128xf32>
    tpu.vector_store %arg6[%c0_5, %c0_6, %c0_7, %c0_8], %9 {strides = array<i32>} : memref<1x8x16x128xf32, #tpu.memory_space<vmem>>, vector<1x8x16x128xf32>,
    %cst_9 = arith.constant 0.000000e+00 : f32
    %10 = vector.broadcast %cst_9 : f32 to vector<10x8x128xf32>
    %c0_10 = arith.constant 0 : index
    %c0_11 = arith.constant 0 : index
    %c0_12 = arith.constant 0 : index
    %11 = vector.load %arg8[%c0_10, %c0_11, %c0_12] : memref<10x32x128xf32, #tpu.memory_space<vmem>>, vector<10x8x128xf32>
    tpu.vector_store %arg8[%c0_10, %c0_11, %c0_12], %10 {strides = array<i32>} : memref<10x32x128xf32, #tpu.memory_space<vmem>>, vector<10x8x128xf32>,
    %cst_13 = arith.constant 0.000000e+00 : f32
    %12 = vector.broadcast %cst_13 : f32 to vector<10x8x128xf32>
    %c0_14 = arith.constant 0 : index
    %c24 = arith.constant 24 : index
    %c0_15 = arith.constant 0 : index
    %13 = vector.load %arg8[%c0_14, %c24, %c0_15] : memref<10x32x128xf32, #tpu.memory_space<vmem>>, vector<10x8x128xf32>
    tpu.vector_store %arg8[%c0_14, %c24, %c0_15], %12 {strides = array<i32>} : memref<10x32x128xf32, #tpu.memory_space<vmem>>, vector<10x8x128xf32>,
    %c0_16 = arith.constant 0 : index
    %c8 = arith.constant 8 : index
    %c0_17 = arith.constant 0 : index
    %14 = vector.load %arg8[%c0_16, %c8, %c0_17] : memref<10x32x128xf32, #tpu.memory_space<vmem>>, vector<10x16x128xf32>
    tpu.vector_store %arg8[%c0_16, %c8, %c0_17], %5 {strides = array<i32>} : memref<10x32x128xf32, #tpu.memory_space<vmem>>, vector<10x16x128xf32>,
    %c0_18 = arith.constant 0 : index
    %c0_19 = arith.constant 0 : index
    %c0_20 = arith.constant 0 : index
    %15 = vector.load %arg4[%c0_18, %c0_19, %c0_20] : memref<9x1x128xf32, #tpu.memory_space<vmem>>, vector<9x1x128xf32>
    %c0_21 = arith.constant 0 : index
    %c0_22 = arith.constant 0 : index
    %16 = vector.load %arg5[%c0_21, %c0_22] : memref<1x128xf32, #tpu.memory_space<vmem>>, vector<1x128xf32>
    %17 = vector.shape_cast %16 : vector<1x128xf32> to vector<1x1x128xf32>
    %18 = vector.broadcast %17 : vector<1x1x128xf32> to vector<8x16x128xf32>
    %c0_23 = arith.constant 0 : index
    %c7 = arith.constant 7 : index
    %c0_24 = arith.constant 0 : index
    %19 = vector.load %arg8[%c0_23, %c7, %c0_24] : memref<10x32x128xf32, #tpu.memory_space<vmem>>, vector<8x16x128xf32>
    %20 = vector.extract_strided_slice %15 {offsets = [0, 0, 0], sizes = [1, 1, 128], strides = [1, 1, 1]} : vector<9x1x128xf32> to vector<1x1x128xf32>
    %21 = vector.shape_cast %20 : vector<1x1x128xf32> to vector<1x128xf32>
    %22 = vector.shape_cast %21 : vector<1x128xf32> to vector<1x1x128xf32>
    %23 = vector.broadcast %22 : vector<1x1x128xf32> to vector<8x16x128xf32>
    %24 = arith.mulf %19, %23 : vector<8x16x128xf32>
    %25 = arith.addf %18, %24 : vector<8x16x128xf32>
    %c0_25 = arith.constant 0 : index
    %c8_26 = arith.constant 8 : index
    %c0_27 = arith.constant 0 : index
    %26 = vector.load %arg8[%c0_25, %c8_26, %c0_27] : memref<10x32x128xf32, #tpu.memory_space<vmem>>, vector<8x16x128xf32>
    %27 = vector.extract_strided_slice %15 {offsets = [1, 0, 0], sizes = [1, 1, 128], strides = [1, 1, 1]} : vector<9x1x128xf32> to vector<1x1x128xf32>
    %28 = vector.shape_cast %27 : vector<1x1x128xf32> to vector<1x128xf32>
    %29 = vector.shape_cast %28 : vector<1x128xf32> to vector<1x1x128xf32>
    %30 = vector.broadcast %29 : vector<1x1x128xf32> to vector<8x16x128xf32>
    %31 = arith.mulf %26, %30 : vector<8x16x128xf32>
    %32 = arith.addf %25, %31 : vector<8x16x128xf32>
    %c0_28 = arith.constant 0 : index
    %c9 = arith.constant 9 : index
    %c0_29 = arith.constant 0 : index
    %33 = vector.load %arg8[%c0_28, %c9, %c0_29] : memref<10x32x128xf32, #tpu.memory_space<vmem>>, vector<8x16x128xf32>
    %34 = vector.extract_strided_slice %15 {offsets = [2, 0, 0], sizes = [1, 1, 128], strides = [1, 1, 1]} : vector<9x1x128xf32> to vector<1x1x128xf32>
    %35 = vector.shape_cast %34 : vector<1x1x128xf32> to vector<1x128xf32>
    %36 = vector.shape_cast %35 : vector<1x128xf32> to vector<1x1x128xf32>
    %37 = vector.broadcast %36 : vector<1x1x128xf32> to vector<8x16x128xf32>
    %38 = arith.mulf %33, %37 : vector<8x16x128xf32>
    %39 = arith.addf %32, %38 : vector<8x16x128xf32>
    %c1 = arith.constant 1 : index
    %c7_30 = arith.constant 7 : index
    %c0_31 = arith.constant 0 : index
    %40 = vector.load %arg8[%c1, %c7_30, %c0_31] : memref<10x32x128xf32, #tpu.memory_space<vmem>>, vector<8x16x128xf32>
    %41 = vector.extract_strided_slice %15 {offsets = [3, 0, 0], sizes = [1, 1, 128], strides = [1, 1, 1]} : vector<9x1x128xf32> to vector<1x1x128xf32>
    %42 = vector.shape_cast %41 : vector<1x1x128xf32> to vector<1x128xf32>
    %43 = vector.shape_cast %42 : vector<1x128xf32> to vector<1x1x128xf32>
    %44 = vector.broadcast %43 : vector<1x1x128xf32> to vector<8x16x128xf32>
    %45 = arith.mulf %40, %44 : vector<8x16x128xf32>
    %46 = arith.addf %39, %45 : vector<8x16x128xf32>
    %c1_32 = arith.constant 1 : index
    %c8_33 = arith.constant 8 : index
    %c0_34 = arith.constant 0 : index
    %47 = vector.load %arg8[%c1_32, %c8_33, %c0_34] : memref<10x32x128xf32, #tpu.memory_space<vmem>>, vector<8x16x128xf32>
    %48 = vector.extract_strided_slice %15 {offsets = [4, 0, 0], sizes = [1, 1, 128], strides = [1, 1, 1]} : vector<9x1x128xf32> to vector<1x1x128xf32>
    %49 = vector.shape_cast %48 : vector<1x1x128xf32> to vector<1x128xf32>
    %50 = vector.shape_cast %49 : vector<1x128xf32> to vector<1x1x128xf32>
    %51 = vector.broadcast %50 : vector<1x1x128xf32> to vector<8x16x128xf32>
    %52 = arith.mulf %47, %51 : vector<8x16x128xf32>
    %53 = arith.addf %46, %52 : vector<8x16x128xf32>
    %c1_35 = arith.constant 1 : index
    %c9_36 = arith.constant 9 : index
    %c0_37 = arith.constant 0 : index
    %54 = vector.load %arg8[%c1_35, %c9_36, %c0_37] : memref<10x32x128xf32, #tpu.memory_space<vmem>>, vector<8x16x128xf32>
    %55 = vector.extract_strided_slice %15 {offsets = [5, 0, 0], sizes = [1, 1, 128], strides = [1, 1, 1]} : vector<9x1x128xf32> to vector<1x1x128xf32>
    %56 = vector.shape_cast %55 : vector<1x1x128xf32> to vector<1x128xf32>
    %57 = vector.shape_cast %56 : vector<1x128xf32> to vector<1x1x128xf32>
    %58 = vector.broadcast %57 : vector<1x1x128xf32> to vector<8x16x128xf32>
    %59 = arith.mulf %54, %58 : vector<8x16x128xf32>
    %60 = arith.addf %53, %59 : vector<8x16x128xf32>
    %c2 = arith.constant 2 : index
    %c7_38 = arith.constant 7 : index
    %c0_39 = arith.constant 0 : index
    %61 = vector.load %arg8[%c2, %c7_38, %c0_39] : memref<10x32x128xf32, #tpu.memory_space<vmem>>, vector<8x16x128xf32>
    %62 = vector.extract_strided_slice %15 {offsets = [6, 0, 0], sizes = [1, 1, 128], strides = [1, 1, 1]} : vector<9x1x128xf32> to vector<1x1x128xf32>
    %63 = vector.shape_cast %62 : vector<1x1x128xf32> to vector<1x128xf32>
    %64 = vector.shape_cast %63 : vector<1x128xf32> to vector<1x1x128xf32>
    %65 = vector.broadcast %64 : vector<1x1x128xf32> to vector<8x16x128xf32>
    %66 = arith.mulf %61, %65 : vector<8x16x128xf32>
    %67 = arith.addf %60, %66 : vector<8x16x128xf32>
    %c2_40 = arith.constant 2 : index
    %c8_41 = arith.constant 8 : index
    %c0_42 = arith.constant 0 : index
    %68 = vector.load %arg8[%c2_40, %c8_41, %c0_42] : memref<10x32x128xf32, #tpu.memory_space<vmem>>, vector<8x16x128xf32>
    %69 = vector.extract_strided_slice %15 {offsets = [7, 0, 0], sizes = [1, 1, 128], strides = [1, 1, 1]} : vector<9x1x128xf32> to vector<1x1x128xf32>
    %70 = vector.shape_cast %69 : vector<1x1x128xf32> to vector<1x128xf32>
    %71 = vector.shape_cast %70 : vector<1x128xf32> to vector<1x1x128xf32>
    %72 = vector.broadcast %71 : vector<1x1x128xf32> to vector<8x16x128xf32>
    %73 = arith.mulf %68, %72 : vector<8x16x128xf32>
    %74 = arith.addf %67, %73 : vector<8x16x128xf32>
    %c2_43 = arith.constant 2 : index
    %c9_44 = arith.constant 9 : index
    %c0_45 = arith.constant 0 : index
    %75 = vector.load %arg8[%c2_43, %c9_44, %c0_45] : memref<10x32x128xf32, #tpu.memory_space<vmem>>, vector<8x16x128xf32>
    %76 = vector.extract_strided_slice %15 {offsets = [8, 0, 0], sizes = [1, 1, 128], strides = [1, 1, 1]} : vector<9x1x128xf32> to vector<1x1x128xf32>
    %77 = vector.shape_cast %76 : vector<1x1x128xf32> to vector<1x128xf32>
    %78 = vector.shape_cast %77 : vector<1x128xf32> to vector<1x1x128xf32>
    %79 = vector.broadcast %78 : vector<1x1x128xf32> to vector<8x16x128xf32>
    %80 = arith.mulf %75, %79 : vector<8x16x128xf32>
    %81 = arith.addf %74, %80 : vector<8x16x128xf32>
    %c0_46 = arith.constant 0 : index
    %c0_47 = arith.constant 0 : index
    %c0_48 = arith.constant 0 : index
    %c0_49 = arith.constant 0 : index
    %82 = vector.load %arg7[%c0_46, %c0_47, %c0_48, %c0_49] : memref<1x8x16x128xf32, #tpu.memory_space<vmem>>, vector<1x8x16x128xf32>
    %83 = vector.shape_cast %82 : vector<1x8x16x128xf32> to vector<8x16x128xf32>
    %84 = vector.shape_cast %81 : vector<8x16x128xf32> to vector<1x8x16x128xf32>
    tpu.vector_store %arg7[%c0_46, %c0_47, %c0_48, %c0_49], %84 {strides = array<i32>} : memref<1x8x16x128xf32, #tpu.memory_space<vmem>>, vector<1x8x16x128xf32>,
    return
  }
  func.func @transform_0(%arg0: i32, %arg1: i32) -> (i32, i32, i32, i32) {
    %c2_i32 = arith.constant 2 : i32
    %0 = arith.muli %arg0, %c2_i32 : i32
    %1 = arith.addi %0, %arg1 : i32
    %c0_i32 = arith.constant 0 : i32
    %c0_i32_0 = arith.constant 0 : i32
    %c0_i32_1 = arith.constant 0 : i32
    %c0_i32_2 = arith.constant 0 : i32
    return %1, %c0_i32, %c0_i32_0, %c0_i32_1 : i32, i32, i32, i32
  }
  func.func @transform_1(%arg0: i32, %arg1: i32) -> (i32, i32) {
    %c0_i32 = arith.constant 0 : i32
    %c0_i32_0 = arith.constant 0 : i32
    %c0_i32_1 = arith.constant 0 : i32
    return %c0_i32, %c0_i32_0 : i32, i32
  }
  func.func @transform_2(%arg0: i32, %arg1: i32) -> (i32, i32, i32) {
    %c0_i32 = arith.constant 0 : i32
    %c0_i32_0 = arith.constant 0 : i32
    %c0_i32_1 = arith.constant 0 : i32
    %c0_i32_2 = arith.constant 0 : i32
    return %c0_i32, %c0_i32_0, %c0_i32_1 : i32, i32, i32
  }
  func.func @transform_3(%arg0: i32, %arg1: i32) -> (i32, i32) {
    %c0_i32 = arith.constant 0 : i32
    %c0_i32_0 = arith.constant 0 : i32
    %c0_i32_1 = arith.constant 0 : i32
    return %c0_i32, %c0_i32_0 : i32, i32
  }
  func.func @transform_4(%arg0: i32, %arg1: i32) -> (i32, i32, i32, i32) {
    %c0_i32 = arith.constant 0 : i32
    %c0_i32_0 = arith.constant 0 : i32
    %c0_i32_1 = arith.constant 0 : i32
    return %arg0, %arg1, %c0_i32, %c0_i32_0 : i32, i32, i32, i32
  }
  func.func @transform_5(%arg0: i32, %arg1: i32) -> (i32, i32, i32, i32) {
    %c0_i32 = arith.constant 0 : i32
    %c0_i32_0 = arith.constant 0 : i32
    %c0_i32_1 = arith.constant 0 : i32
    return %arg0, %arg1, %c0_i32, %c0_i32_0 : i32, i32, i32, i32
  }
}

</mosaic_0001>

<llo_original>
// kernel: tpu_custom_call.1
$region0: #{tpu_custom_call.1}
  #allocation0 [shape = 'u32[]', space=smem, size = 0x4, offset = 0x4, fixed_abs, tag = 'smem constant byte address 0x4 - core index']
  #allocation1 [shape = 'u32[144,128]{1,0:T(1,128)}', space=vmem, size = 0x12000, scoped, tag = 'internal scratch']
  #allocation2 [shape = 'f32[10,32,128]{2,1,0:T(8,128)}', space=vmem, size = 0x28000, scoped, tag = 'scratch operand']
  %s0 = inlined_call_operand.hbm [shape: f32[4,10,16,128], index: 0, kind: input, shape index: {}]
  %s1 = inlined_call_operand.hbm [shape: f32[128,128], index: 1, kind: input, shape index: {}]
  %s2 = inlined_call_operand.hbm [shape: f32[9,1,128], index: 2, kind: input, shape index: {}]
  %s3 = inlined_call_operand.vmem [shape: f32[1,128], index: 3, kind: input, shape index: {}]
  %s4 = inlined_call_operand.hbm [shape: f32[2,16,16,128], index: 4, kind: output, shape index: {0}]
  %s5 = inlined_call_operand.hbm [shape: f32[2,16,16,128], index: 5, kind: output, shape index: {1}]
  %6 = xla_tuple %s4, %s5
  %s7 = sld [smem:[#allocation0]]
  $region69: #{tpu_custom_call.1} parent=0
    _
  %s9 = ssub.s32 1, %s7
  %s10 = scalar_select 0, %s9, %s7
  $region1: #{tpu_custom_call.1} parent=0
    #allocation3 [shape = 'u8[163840]{0}', space=vmem, size = 0x28000, scoped, tag = 'input window, operand 0']
    #allocation4 [shape = 's32[2]{0}', space=sflag, size = 0x8, scoped, tag = 'scoped memory for tpu_custom_call.1']
    #allocation5 [shape = 's32[2]{0}', space=sflag, size = 0x8, scoped, tag = 'scoped memory for tpu_custom_call.1']
    #allocation6 [shape = 'u8[65536]{0}', space=vmem, size = 0x10000, scoped, tag = 'input window, operand 1, single buffered']
    #allocation7 [shape = 's32[1]{0}', space=sflag, size = 0x4, scoped, tag = 'scoped memory for tpu_custom_call.1']
    #allocation8 [shape = 'u8[4608]{0}', space=vmem, size = 0x1400, scoped, tag = 'input window, operand 2, single buffered']
    #allocation9 [shape = 'u8[131072]{0}', space=vmem, size = 0x20000, scoped, tag = 'output window, operand 0']
    #allocation10 [shape = 'u8[131072]{0}', space=vmem, size = 0x20000, scoped, tag = 'output window, operand 1']
    #allocation11 [shape = 's32[2]{0}', space=sflag, size = 0x8, scoped, tag = 'scoped memory for tpu_custom_call.1']
    %11 = vsyncpa [#allocation4], 0
    %s12 = scalar_lea.sflag [#allocation4], 1
    %13 = vsyncpa %s12, 0
    %14 = vsyncpa [#allocation7], 0
    %15 = vsyncpa [#allocation5], 0
    %s16 = scalar_lea.sflag [#allocation5], 1
    %17 = vsyncpa %s16, 0
    %18 = vsyncpa [#allocation11], 0
    %s19 = scalar_lea.sflag [#allocation11], 1
    %20 = vsyncpa %s19, 0
    loop: start=0, step=1, limit=6
    $region2: #{tpu_custom_call.1} parent=1 // loop_pre_header
      _
    $region3: #{tpu_custom_call.1} parent=1 // loop_header
      %s22 = sphi 0, %s26
      %p23 = scmp.ge.s32.totalorder %s22, 6
      %s29 = sphi 0, %s41
      %s30 = sphi 0, %s37
      %s31 = sphi 0, %s29
      %s32 = sphi 0, %s30
      %s33 = sphi 0, %s31
      %s34 = sphi 0, %s32
      %s48 = sphi 0, %s50
      %s51 = sphi 0, %s48
      %s52 = sphi 0, %s51
      %s68 = sphi 0, %s52
      %s72 = sphi 0, %s72
      %s74 = sphi 0, %s72
      %s75 = sphi 0, %s74
      %s89 = sphi 0, %s75
      %s93 = sphi 0, %s93
      %s95 = sphi 0, %s93
      %s96 = sphi 0, %s95
      %s110 = sphi 0, %s96
      %s114 = sphi 0, %s114
      %s116 = sphi 0, %s114
      %s117 = sphi 0, %s116
      %s131 = sphi 0, %s117
      %s139 = sphi 0, %s141
      %s142 = sphi 0, %s139
      %s143 = sphi 0, %s142
      %s159 = sphi 0, %s143
      %s167 = sphi 0, %s169
      %s170 = sphi 0, %s167
      %s171 = sphi 0, %s170
      %s187 = sphi 0, %s171
    $region4: #{tpu_custom_call.1} parent=1 // loop_header_branch
      %25 = sbr.rel (%p23) target = $region8
    $region5: #{tpu_custom_call.1} parent=1 // loop_body
      %s27 = ssub.s32 %s22, 1
      %s28 = ssub.s32 %s22, 2
      %s35 = sadd.s32 1, %s30
      %p36 = scmp.ge.s32.totalorder %s35, 2
      %s37 = scalar_select %p36, 0, %s35
      %s38 = sadd.s32 1, %s29
      %s39 = scalar_select %p36, %s38, %s29
      %p40 = scmp.ge.s32.totalorder %s39, 2
      %s41 = scalar_select %p40, 0, %s39
      %s42 = smul.u32 %s29, 2
      %s43 = sadd.s32 %s42, %s30
      %s44 = smul.u32 %s41, 2
      %s45 = sadd.s32 %s44, %s37
      %s46 = ssub.s32 %s43, %s45
      %p47 = scmp.eq.s32.totalorder %s46, 0
      %s49 = sadd.s32 %s48, 1
      %s50 = scalar_select %p47, %s48, %s49
      %p53 = pneg %p47
      %p54 = scmp.eq.s32.totalorder %s22, 3
      %p55 = por %p53, %p54
      %p56 = scmp.ne.s32.totalorder %s48, %s51
      %p57 = scmp.eq.s32.totalorder %s22, 0
      %p58 = por %p56, %p57
      %p59 = scmp.ne.s32.totalorder %s48, %s51
      %p60 = scmp.eq.s32.totalorder %s27, 3
      %p61 = por %p59, %p60
      %p62 = scmp.ne.s32.totalorder %s51, %s52
      %p63 = scmp.eq.s32.totalorder %s27, 0
      %p64 = por %p62, %p63
      %p65 = scmp.ne.s32.totalorder %s51, %s52
      %p66 = scmp.eq.s32.totalorder %s28, 3
      %p67 = por %p65, %p66
      %p69 = scmp.ne.s32.totalorder %s52, %s68
      %p70 = scmp.eq.s32.totalorder %s28, 0
      %p71 = por %p69, %p70
      %s73 = sadd.s32 %s72, 1
      %p76 = scmp.eq.s32.totalorder %s22, 3
      %p77 = scmp.ne.s32.totalorder %s72, %s74
      %p78 = scmp.eq.s32.totalorder %s22, 0
      %p79 = por %p77, %p78
      %p80 = scmp.ne.s32.totalorder %s72, %s74
      %p81 = scmp.eq.s32.totalorder %s27, 3
      %p82 = por %p80, %p81
      %p83 = scmp.ne.s32.totalorder %s74, %s75
      %p84 = scmp.eq.s32.totalorder %s27, 0
      %p85 = por %p83, %p84
      %p86 = scmp.ne.s32.totalorder %s74, %s75
      %p87 = scmp.eq.s32.totalorder %s28, 3
      %p88 = por %p86, %p87
      %p90 = scmp.ne.s32.totalorder %s75, %s89
      %p91 = scmp.eq.s32.totalorder %s28, 0
      %p92 = por %p90, %p91
      %s94 = sadd.s32 %s93, 1
      %p97 = scmp.eq.s32.totalorder %s22, 3
      %p98 = scmp.ne.s32.totalorder %s93, %s95
      %p99 = scmp.eq.s32.totalorder %s22, 0
      %p100 = por %p98, %p99
      %p101 = scmp.ne.s32.totalorder %s93, %s95
      %p102 = scmp.eq.s32.totalorder %s27, 3
      %p103 = por %p101, %p102
      %p104 = scmp.ne.s32.totalorder %s95, %s96
      %p105 = scmp.eq.s32.totalorder %s27, 0
      %p106 = por %p104, %p105
      %p107 = scmp.ne.s32.totalorder %s95, %s96
      %p108 = scmp.eq.s32.totalorder %s28, 3
      %p109 = por %p107, %p108
      %p111 = scmp.ne.s32.totalorder %s96, %s110
      %p112 = scmp.eq.s32.totalorder %s28, 0
      %p113 = por %p111, %p112
      %s115 = sadd.s32 %s114, 1
      %p118 = scmp.eq.s32.totalorder %s22, 3
      %p119 = scmp.ne.s32.totalorder %s114, %s116
      %p120 = scmp.eq.s32.totalorder %s22, 0
      %p121 = por %p119, %p120
      %p122 = scmp.ne.s32.totalorder %s114, %s116
      %p123 = scmp.eq.s32.totalorder %s27, 3
      %p124 = por %p122, %p123
      %p125 = scmp.ne.s32.totalorder %s116, %s117
      %p126 = scmp.eq.s32.totalorder %s27, 0
      %p127 = por %p125, %p126
      %p128 = scmp.ne.s32.totalorder %s116, %s117
      %p129 = scmp.eq.s32.totalorder %s28, 3
      %p130 = por %p128, %p129
      %p132 = scmp.ne.s32.totalorder %s117, %s131
      %p133 = scmp.eq.s32.totalorder %s28, 0
      %p134 = por %p132, %p133
      %s135 = ssub.s32 %s29, %s41
      %s136 = ssub.s32 %s30, %s37
      %s137 = sor.u32 %s135, %s136
      %p138 = scmp.eq.s32.totalorder %s137, 0
      %s140 = sadd.s32 %s139, 1
      %s141 = scalar_select %p138, %s139, %s140
      %p144 = pneg %p138
      %p145 = scmp.eq.s32.totalorder %s22, 3
      %p146 = por %p144, %p145
      %p147 = scmp.ne.s32.totalorder %s139, %s142
      %p148 = scmp.eq.s32.totalorder %s22, 0
      %p149 = por %p147, %p148
      %p150 = scmp.ne.s32.totalorder %s139, %s142
      %p151 = scmp.eq.s32.totalorder %s27, 3
      %p152 = por %p150, %p151
      %p153 = scmp.ne.s32.totalorder %s142, %s143
      %p154 = scmp.eq.s32.totalorder %s27, 0
      %p155 = por %p153, %p154
      %p156 = scmp.ne.s32.totalorder %s142, %s143
      %p157 = scmp.eq.s32.totalorder %s28, 3
      %p158 = por %p156, %p157
      %p160 = scmp.ne.s32.totalorder %s143, %s159
      %p161 = scmp.eq.s32.totalorder %s28, 0
      %p162 = por %p160, %p161
      %s163 = ssub.s32 %s29, %s41
      %s164 = ssub.s32 %s30, %s37
      %s165 = sor.u32 %s163, %s164
      %p166 = scmp.eq.s32.totalorder %s165, 0
      %s168 = sadd.s32 %s167, 1
      %s169 = scalar_select %p166, %s167, %s168
      %p172 = pneg %p166
      %p173 = scmp.eq.s32.totalorder %s22, 3
      %p174 = por %p172, %p173
      %p175 = scmp.ne.s32.totalorder %s167, %s170
      %p176 = scmp.eq.s32.totalorder %s22, 0
      %p177 = por %p175, %p176
      %p178 = scmp.ne.s32.totalorder %s167, %s170
      %p179 = scmp.eq.s32.totalorder %s27, 3
      %p180 = por %p178, %p179
      %p181 = scmp.ne.s32.totalorder %s170, %s171
      %p182 = scmp.eq.s32.totalorder %s27, 0
      %p183 = por %p181, %p182
      %p184 = scmp.ne.s32.totalorder %s170, %s171
      %p185 = scmp.eq.s32.totalorder %s28, 3
      %p186 = por %p184, %p185
      %p188 = scmp.ne.s32.totalorder %s171, %s187
      %p189 = scmp.eq.s32.totalorder %s28, 0
      %p190 = por %p188, %p189
      %p191 = scmp.le.s32.totalorder 1, %s22
      %p192 = scmp.lt.s32.totalorder %s22, 5
      %p193 = pnand %p191, %p192
      %p194 = pneg %p193
      // Predicated region
      $region9: #{tpu_custom_call.1} parent=5 // pred_check
        _
      $region10: #{tpu_custom_call.1} parent=5 // pred_check_branch
        %196 = sbr.rel (%p193) target = $region12
      $region11: #{tpu_custom_call.1} parent=5 // pred_region
        %s197 = ssub.s32 %s22, 1
        // Predicated region
        $region13: #{tpu_custom_call.1} parent=11 // pred_check
          %p198 = pneg %p85
        $region14: #{tpu_custom_call.1} parent=11 // pred_check_branch
          %200 = sbr.rel (%p198) target = $region16
        $region15: #{tpu_custom_call.1} parent=11 // pred_region
          %s202 = ssub.s32 2048, 2048
          %203 = vsyncadd [#allocation7], %s202
          %s204 = sshll.u32 [#allocation6], 4
          %s205 = int_to_ptr.vmem [resolvable:$true] %s204
          %210 = dma.hbm_to_vmem [thread:$0]  %s1, 2048, %s205, [#allocation7], 128, 128, 8
        $region16: #{tpu_custom_call.1} parent=11 // pred_fallthru
          _
        // Predicated region
        $region17: #{tpu_custom_call.1} parent=11 // pred_check
          %p211 = pneg %p106
        $region18: #{tpu_custom_call.1} parent=11 // pred_check_branch
          %213 = sbr.rel (%p211) target = $region20
        $region19: #{tpu_custom_call.1} parent=11 // pred_region
          %s215 = ssub.s32 144, 144
          %216 = vsyncadd [#allocation7], %s215
          %s217 = sshll.u32 [#allocation8], 4
          %s218 = int_to_ptr.vmem [resolvable:$true] %s217
          %223 = dma.hbm_to_vmem [thread:$0]  %s2, 144, %s218, [#allocation7], 16, 16, 1
        $region20: #{tpu_custom_call.1} parent=11 // pred_fallthru
          _
        // Predicated region
        $region21: #{tpu_custom_call.1} parent=11 // pred_check
          %p224 = pneg %p127
        $region22: #{tpu_custom_call.1} parent=11 // pred_check_branch
          %226 = sbr.rel (%p224) target = $region24
        $region23: #{tpu_custom_call.1} parent=11 // pred_region
          _
        $region24: #{tpu_custom_call.1} parent=11 // pred_fallthru
          _
      $region12: #{tpu_custom_call.1} parent=5 // pred_fallthru
        _
      %p227 = scmp.lt.s32.totalorder %s22, 4
      // Predicated region
      $region25: #{tpu_custom_call.1} parent=5 // pred_check
        %p228 = pneg %p227
      $region26: #{tpu_custom_call.1} parent=5 // pred_check_branch
        %230 = sbr.rel (%p228) target = $region28
      $region27: #{tpu_custom_call.1} parent=5 // pred_region
        // Predicated region
        $region29: #{tpu_custom_call.1} parent=27 // pred_check
          %p231 = pneg %p58
        $region30: #{tpu_custom_call.1} parent=27 // pred_check_branch
          %233 = sbr.rel (%p231) target = $region32
        $region31: #{tpu_custom_call.1} parent=27 // pred_region
          %s234 = sand.u32 %s48, 1
          %s235 = scalar_lea.sflag [#allocation4], %s234
          %s236 = sand.u32 %s48, 1
          %s237 = smul.addr %s236, 160
          %s238 = scalar_lea.vmem [#allocation3], %s237
          %s239 = smul.u32 %s29, 2
          %s240 = sadd.s32 %s239, %s30
          %s242 = ssub.s32 2560, 2560
          %243 = vsyncadd %s235, %s242
          %s244 = smul.addr %s240, 20
          %s245 = smul.addr %s244, 128
          %s246 = scalar_lea.hbm %s0, %s245
          %s247 = sshll.u32 %s238, 4
          %s248 = int_to_ptr.vmem [resolvable:$true] %s247
          %253 = dma.hbm_to_vmem [thread:$0]  %s246, 2560, %s248, %s235, 128, 128, 8
        $region32: #{tpu_custom_call.1} parent=27 // pred_fallthru
          _
      $region28: #{tpu_custom_call.1} parent=5 // pred_fallthru
        _
      %p254 = scmp.le.s32.totalorder 1, %s22
      %p255 = scmp.lt.s32.totalorder %s22, 5
      %p256 = pnand %p254, %p255
      %p257 = pneg %p256
      // Predicated region
      $region33: #{tpu_custom_call.1} parent=5 // pred_check
        _
      $region34: #{tpu_custom_call.1} parent=5 // pred_check_branch
        %259 = sbr.rel (%p256) target = $region36
      $region35: #{tpu_custom_call.1} parent=5 // pred_region
        %s260 = ssub.s32 %s22, 1
        %s261 = sand.u32 %s51, 1
        %s262 = scalar_lea.sflag [#allocation4], %s261
        %s263 = sand.u32 %s51, 1
        %s264 = smul.addr %s263, 160
        %s265 = scalar_lea.vmem [#allocation3], %s264
        // Predicated region
        $region37: #{tpu_custom_call.1} parent=35 // pred_check
          %p266 = pneg %p64
        $region38: #{tpu_custom_call.1} parent=35 // pred_check_branch
          %268 = sbr.rel (%p266) target = $region40
        $region39: #{tpu_custom_call.1} parent=35 // pred_region
          %269 = dma.done %s262, 2560
        $region40: #{tpu_custom_call.1} parent=35 // pred_fallthru
          _
        // Predicated region
        $region41: #{tpu_custom_call.1} parent=35 // pred_check
          %p270 = pneg %p85
        $region42: #{tpu_custom_call.1} parent=35 // pred_check_branch
          %272 = sbr.rel (%p270) target = $region44
        $region43: #{tpu_custom_call.1} parent=35 // pred_region
          %273 = dma.done [#allocation7], 2048
        $region44: #{tpu_custom_call.1} parent=35 // pred_fallthru
          _
        // Predicated region
        $region45: #{tpu_custom_call.1} parent=35 // pred_check
          %p274 = pneg %p106
        $region46: #{tpu_custom_call.1} parent=35 // pred_check_branch
          %276 = sbr.rel (%p274) target = $region48
        $region47: #{tpu_custom_call.1} parent=35 // pred_region
          %277 = dma.done [#allocation7], 144
        $region48: #{tpu_custom_call.1} parent=35 // pred_fallthru
          _
        %s278 = sand.u32 %s51, 1
        %s279 = scalar_lea.sflag [#allocation4], %s278
        %s280 = sand.u32 %s51, 1
        %s281 = smul.addr %s280, 160
        %s282 = scalar_lea.vmem [#allocation3], %s281
        %p283 = pneg %p64
        %p284 = pneg %p61
        %p285 = pneg %p85
        %p286 = pneg %p82
        %p287 = pneg %p106
        %p288 = pneg %p103
        %p289 = pneg %p127
        %p290 = pneg %p124
        %p291 = pneg %p155
        %p292 = pneg %p152
        %s293 = sand.u32 %s142, 1
        %s294 = scalar_lea.sflag [#allocation5], %s293
        %s295 = sand.u32 %s142, 1
        %s296 = smul.addr %s295, 128
        %s297 = scalar_lea.vmem [#allocation9], %s296
        %p298 = pneg %p183
        %p299 = pneg %p180
        %s300 = sand.u32 %s170, 1
        %s301 = scalar_lea.sflag [#allocation11], %s300
        %s302 = sand.u32 %s170, 1
        %s303 = smul.addr %s302, 128
        %s304 = scalar_lea.vmem [#allocation10], %s303
        %s305 = smul.u32 %s31, 2
        %s306 = sadd.s32 %s305, %s32
        %s307 = smul.u32 8, %s32
        %s308 = smul.u32 8, %s32
        %v309 = vld [vmem:[%s265] sm:$0xff]
        %v310 = vld [vmem:[%s265 + $0x8] sm:$0xff]
        %v311 = vld [vmem:[%s265 + $0x10] sm:$0xff]
        %v312 = vld [vmem:[%s265 + $0x18] sm:$0xff]
        %v313 = vld [vmem:[%s265 + $0x20] sm:$0xff]
        %v314 = vld [vmem:[%s265 + $0x28] sm:$0xff]
        %v315 = vld [vmem:[%s265 + $0x30] sm:$0xff]
        %v316 = vld [vmem:[%s265 + $0x38] sm:$0xff]
        %v317 = vld [vmem:[%s265 + $0x40] sm:$0xff]
        %v318 = vld [vmem:[%s265 + $0x48] sm:$0xff]
        %v319 = vld [vmem:[%s265 + $0x50] sm:$0xff]
        %v320 = vld [vmem:[%s265 + $0x58] sm:$0xff]
        %v321 = vld [vmem:[%s265 + $0x60] sm:$0xff]
        %v322 = vld [vmem:[%s265 + $0x68] sm:$0xff]
        %v323 = vld [vmem:[%s265 + $0x70] sm:$0xff]
        %v324 = vld [vmem:[%s265 + $0x78] sm:$0xff]
        %v325 = vld [vmem:[%s265 + $0x80] sm:$0xff]
        %v326 = vld [vmem:[%s265 + $0x88] sm:$0xff]
        %v327 = vld [vmem:[%s265 + $0x90] sm:$0xff]
        %v328 = vld [vmem:[%s265 + $0x98] sm:$0xff]
        %v329 = vld [vmem:[#allocation6] sm:$0xff]
        %v330 = vld [vmem:[#allocation6 + $0x8] sm:$0xff]
        %v331 = vld [vmem:[#allocation6 + $0x10] sm:$0xff]
        %v332 = vld [vmem:[#allocation6 + $0x18] sm:$0xff]
        %v333 = vld [vmem:[#allocation6 + $0x20] sm:$0xff]
        %v334 = vld [vmem:[#allocation6 + $0x28] sm:$0xff]
        %v335 = vld [vmem:[#allocation6 + $0x30] sm:$0xff]
        %v336 = vld [vmem:[#allocation6 + $0x38] sm:$0xff]
        %v337 = vld [vmem:[#allocation6 + $0x40] sm:$0xff]
        %v338 = vld [vmem:[#allocation6 + $0x48] sm:$0xff]
        %v339 = vld [vmem:[#allocation6 + $0x50] sm:$0xff]
        %v340 = vld [vmem:[#allocation6 + $0x58] sm:$0xff]
        %v341 = vld [vmem:[#allocation6 + $0x60] sm:$0xff]
        %v342 = vld [vmem:[#allocation6 + $0x68] sm:$0xff]
        %v343 = vld [vmem:[#allocation6 + $0x70] sm:$0xff]
        %v344 = vld [vmem:[#allocation6 + $0x78] sm:$0xff]
        %345 = vmatprep.subr.mxu0 0.0
        %346 = vmatpush1.msra.mxu0 %v344
        %347 = vmatprep.subr.mxu0 0.0
        %348 = vmatpush1.msra.mxu0 %v343
        %349 = vmatprep.subr.mxu0 0.0
        %350 = vmatpush1.msra.mxu0 %v342
        %351 = vmatprep.subr.mxu0 0.0
        %352 = vmatpush1.msra.mxu0 %v341
        %353 = vmatprep.subr.mxu0 0.0
        %354 = vmatpush1.msra.mxu0 %v340
        %355 = vmatprep.subr.mxu0 0.0
        %356 = vmatpush1.msra.mxu0 %v339
        %357 = vmatprep.subr.mxu0 0.0
        %358 = vmatpush1.msra.mxu0 %v338
        %359 = vmatprep.subr.mxu0 0.0
        %360 = vmatpush1.msra.mxu0 %v337
        %361 = vmatprep.subr.mxu0 0.0
        %362 = vmatpush1.msra.mxu0 %v336
        %363 = vmatprep.subr.mxu0 0.0
        %364 = vmatpush1.msra.mxu0 %v335
        %365 = vmatprep.subr.mxu0 0.0
        %366 = vmatpush1.msra.mxu0 %v334
        %367 = vmatprep.subr.mxu0 0.0
        %368 = vmatpush1.msra.mxu0 %v333
        %369 = vmatprep.subr.mxu0 0.0
        %370 = vmatpush1.msra.mxu0 %v332
        %371 = vmatprep.subr.mxu0 0.0
        %372 = vmatpush1.msra.mxu0 %v331
        %373 = vmatprep.subr.mxu0 0.0
        %374 = vmatpush1.msra.mxu0 %v330
        %375 = vmatprep.subr.mxu0 0.0
        %376 = vmatpush1.msra.mxu0 %v329
        %377 = vmatprep.subr.mxu0 0.0
        %378 = vmatpush2.msra.mxu0 0.0
        %379 = vmatprep.subr.mxu0 0.0
        %380 = vmatpush2.msra.mxu0 0.0
        %381 = vmatprep.subr.mxu0 0.0
        %382 = vmatpush2.msra.mxu0 0.0
        %383 = vmatprep.subr.mxu0 0.0
        %384 = vmatpush2.msra.mxu0 0.0
        %385 = vmatprep.subr.mxu0 0.0
        %386 = vmatpush2.msra.mxu0 0.0
        %387 = vmatprep.subr.mxu0 0.0
        %388 = vmatpush2.msra.mxu0 0.0
        %389 = vmatprep.subr.mxu0 0.0
        %390 = vmatpush2.msra.mxu0 0.0
        %391 = vmatprep.subr.mxu0 0.0
        %392 = vmatpush2.msra.mxu0 0.0
        %393 = vmatprep.subr.mxu0 0.0
        %394 = vmatpush2.msra.mxu0 0.0
        %395 = vmatprep.subr.mxu0 0.0
        %396 = vmatpush2.msra.mxu0 0.0
        %397 = vmatprep.subr.mxu0 0.0
        %398 = vmatpush2.msra.mxu0 0.0
        %399 = vmatprep.subr.mxu0 0.0
        %400 = vmatpush2.msra.mxu0 0.0
        %401 = vmatprep.subr.mxu0 0.0
        %402 = vmatpush2.msra.mxu0 0.0
        %403 = vmatprep.subr.mxu0 0.0
        %404 = vmatpush2.msra.mxu0 0.0
        %405 = vmatprep.subr.mxu0 0.0
        %406 = vmatpush2.msra.mxu0 0.0
        %407 = vmatprep.subr.mxu0 0.0
        %408 = vmatpush2.msra.mxu0 0.0
        %409 = vmatprep.mubr.f32.mxu0 0.0
        %410 = vmatmul.mubr.f32.gmra.mxu0 %v309
        %v411 = vpop.f32.mrf.mxu0
        %v412 = vadd.f32 0.0, %v411
        %v413 = vpop.f32.mrf.mxu0
        %414 = vmatprep.mubr.f32.mxu0 0.0
        %415 = vmatmul.mubr.f32.gmra.mxu0 %v310
        %v416 = vpop.f32.mrf.mxu0
        %v417 = vadd.f32 0.0, %v416
        %v418 = vpop.f32.mrf.mxu0
        %419 = vmatprep.mubr.f32.mxu0 0.0
        %420 = vmatmul.mubr.f32.gmra.mxu0 %v311
        %v421 = vpop.f32.mrf.mxu0
        %v422 = vadd.f32 0.0, %v421
        %v423 = vpop.f32.mrf.mxu0
        %424 = vmatprep.mubr.f32.mxu0 0.0
        %425 = vmatmul.mubr.f32.gmra.mxu0 %v312
        %v426 = vpop.f32.mrf.mxu0
        %v427 = vadd.f32 0.0, %v426
        %v428 = vpop.f32.mrf.mxu0
        %429 = vmatprep.mubr.f32.mxu0 0.0
        %430 = vmatmul.mubr.f32.gmra.mxu0 %v313
        %v431 = vpop.f32.mrf.mxu0
        %v432 = vadd.f32 0.0, %v431
        %v433 = vpop.f32.mrf.mxu0
        %434 = vmatprep.mubr.f32.mxu0 0.0
        %435 = vmatmul.mubr.f32.gmra.mxu0 %v314
        %v436 = vpop.f32.mrf.mxu0
        %v437 = vadd.f32 0.0, %v436
        %v438 = vpop.f32.mrf.mxu0
        %439 = vmatprep.mubr.f32.mxu0 0.0
        %440 = vmatmul.mubr.f32.gmra.mxu0 %v315
        %v441 = vpop.f32.mrf.mxu0
        %v442 = vadd.f32 0.0, %v441
        %v443 = vpop.f32.mrf.mxu0
        %444 = vmatprep.mubr.f32.mxu0 0.0
        %445 = vmatmul.mubr.f32.gmra.mxu0 %v316
        %v446 = vpop.f32.mrf.mxu0
        %v447 = vadd.f32 0.0, %v446
        %v448 = vpop.f32.mrf.mxu0
        %449 = vmatprep.mubr.f32.mxu0 0.0
        %450 = vmatmul.mubr.f32.gmra.mxu0 %v317
        %v451 = vpop.f32.mrf.mxu0
        %v452 = vadd.f32 0.0, %v451
        %v453 = vpop.f32.mrf.mxu0
        %454 = vmatprep.mubr.f32.mxu0 0.0
        %455 = vmatmul.mubr.f32.gmra.mxu0 %v318
        %v456 = vpop.f32.mrf.mxu0
        %v457 = vadd.f32 0.0, %v456
        %v458 = vpop.f32.mrf.mxu0
        %459 = vmatprep.mubr.f32.mxu0 0.0
        %460 = vmatmul.mubr.f32.gmra.mxu0 %v319
        %v461 = vpop.f32.mrf.mxu0
        %v462 = vadd.f32 0.0, %v461
        %v463 = vpop.f32.mrf.mxu0
        %464 = vmatprep.mubr.f32.mxu0 0.0
        %465 = vmatmul.mubr.f32.gmra.mxu0 %v320
        %v466 = vpop.f32.mrf.mxu0
        %v467 = vadd.f32 0.0, %v466
        %v468 = vpop.f32.mrf.mxu0
        %469 = vmatprep.mubr.f32.mxu0 0.0
        %470 = vmatmul.mubr.f32.gmra.mxu0 %v321
        %v471 = vpop.f32.mrf.mxu0
        %v472 = vadd.f32 0.0, %v471
        %v473 = vpop.f32.mrf.mxu0
        %474 = vmatprep.mubr.f32.mxu0 0.0
        %475 = vmatmul.mubr.f32.gmra.mxu0 %v322
        %v476 = vpop.f32.mrf.mxu0
        %v477 = vadd.f32 0.0, %v476
        %v478 = vpop.f32.mrf.mxu0
        %479 = vmatprep.mubr.f32.mxu0 0.0
        %480 = vmatmul.mubr.f32.gmra.mxu0 %v323
        %v481 = vpop.f32.mrf.mxu0
        %v482 = vadd.f32 0.0, %v481
        %v483 = vpop.f32.mrf.mxu0
        %484 = vmatprep.mubr.f32.mxu0 0.0
        %485 = vmatmul.mubr.f32.gmra.mxu0 %v324
        %v486 = vpop.f32.mrf.mxu0
        %v487 = vadd.f32 0.0, %v486
        %v488 = vpop.f32.mrf.mxu0
        %489 = vmatprep.mubr.f32.mxu0 0.0
        %490 = vmatmul.mubr.f32.gmra.mxu0 %v325
        %v491 = vpop.f32.mrf.mxu0
        %v492 = vadd.f32 0.0, %v491
        %v493 = vpop.f32.mrf.mxu0
        %494 = vmatprep.mubr.f32.mxu0 0.0
        %495 = vmatmul.mubr.f32.gmra.mxu0 %v326
        %v496 = vpop.f32.mrf.mxu0
        %v497 = vadd.f32 0.0, %v496
        %v498 = vpop.f32.mrf.mxu0
        %499 = vmatprep.mubr.f32.mxu0 0.0
        %500 = vmatmul.mubr.f32.gmra.mxu0 %v327
        %v501 = vpop.f32.mrf.mxu0
        %v502 = vadd.f32 0.0, %v501
        %v503 = vpop.f32.mrf.mxu0
        %504 = vmatprep.mubr.f32.mxu0 0.0
        %505 = vmatmul.mubr.f32.gmra.mxu0 %v328
        %v506 = vpop.f32.mrf.mxu0
        %v507 = vadd.f32 0.0, %v506
        %v508 = vpop.f32.mrf.mxu0
        %509 = vdwg.mxu0
        %510 = vst [vmem:[%s297] sm:$0xff] %v422
        %511 = vst [vmem:[%s297 + $0x8] sm:$0xff] %v427
        %512 = vst [vmem:[%s297 + $0x10] sm:$0xff] %v432
        %513 = vst [vmem:[%s297 + $0x18] sm:$0xff] %v437
        %514 = vst [vmem:[%s297 + $0x20] sm:$0xff] %v442
        %515 = vst [vmem:[%s297 + $0x28] sm:$0xff] %v447
        %516 = vst [vmem:[%s297 + $0x30] sm:$0xff] %v452
        %517 = vst [vmem:[%s297 + $0x38] sm:$0xff] %v457
        %518 = vst [vmem:[%s297 + $0x40] sm:$0xff] %v462
        %519 = vst [vmem:[%s297 + $0x48] sm:$0xff] %v467
        %520 = vst [vmem:[%s297 + $0x50] sm:$0xff] %v472
        %521 = vst [vmem:[%s297 + $0x58] sm:$0xff] %v477
        %522 = vst [vmem:[%s297 + $0x60] sm:$0xff] %v482
        %523 = vst [vmem:[%s297 + $0x68] sm:$0xff] %v487
        %524 = vst [vmem:[%s297 + $0x70] sm:$0xff] %v492
        %525 = vst [vmem:[%s297 + $0x78] sm:$0xff] %v497
        %526 = vst [vmem:[#allocation2] sm:$0xff] 0.0
        %527 = vst [vmem:[#allocation2 + $0x20] sm:$0xff] 0.0
        %528 = vst [vmem:[#allocation2 + $0x40] sm:$0xff] 0.0
        %529 = vst [vmem:[#allocation2 + $0x60] sm:$0xff] 0.0
        %530 = vst [vmem:[#allocation2 + $0x80] sm:$0xff] 0.0
        %531 = vst [vmem:[#allocation2 + $0xa0] sm:$0xff] 0.0
        %532 = vst [vmem:[#allocation2 + $0xc0] sm:$0xff] 0.0
        %533 = vst [vmem:[#allocation2 + $0xe0] sm:$0xff] 0.0
        %534 = vst [vmem:[#allocation2 + $0x100] sm:$0xff] 0.0
        %535 = vst [vmem:[#allocation2 + $0x120] sm:$0xff] 0.0
        %536 = vst [vmem:[#allocation2 + $0x18] sm:$0xff] 0.0
        %537 = vst [vmem:[#allocation2 + $0x38] sm:$0xff] 0.0
        %538 = vst [vmem:[#allocation2 + $0x58] sm:$0xff] 0.0
        %539 = vst [vmem:[#allocation2 + $0x78] sm:$0xff] 0.0
        %540 = vst [vmem:[#allocation2 + $0x98] sm:$0xff] 0.0
        %541 = vst [vmem:[#allocation2 + $0xb8] sm:$0xff] 0.0
        %542 = vst [vmem:[#allocation2 + $0xd8] sm:$0xff] 0.0
        %543 = vst [vmem:[#allocation2 + $0xf8] sm:$0xff] 0.0
        %544 = vst [vmem:[#allocation2 + $0x118] sm:$0xff] 0.0
        %545 = vst [vmem:[#allocation2 + $0x138] sm:$0xff] 0.0
        %546 = vst [vmem:[#allocation2 + $0x8] sm:$0xff] %v412
        %547 = vst [vmem:[#allocation2 + $0x10] sm:$0xff] %v417
        %548 = vst [vmem:[#allocation2 + $0x28] sm:$0xff] %v422
        %549 = vst [vmem:[#allocation2 + $0x30] sm:$0xff] %v427
        %550 = vst [vmem:[#allocation2 + $0x48] sm:$0xff] %v432
        %551 = vst [vmem:[#allocation2 + $0x50] sm:$0xff] %v437
        %552 = vst [vmem:[#allocation2 + $0x68] sm:$0xff] %v442
        %553 = vst [vmem:[#allocation2 + $0x70] sm:$0xff] %v447
        %554 = vst [vmem:[#allocation2 + $0x88] sm:$0xff] %v452
        %555 = vst [vmem:[#allocation2 + $0x90] sm:$0xff] %v457
        %556 = vst [vmem:[#allocation2 + $0xa8] sm:$0xff] %v462
        %557 = vst [vmem:[#allocation2 + $0xb0] sm:$0xff] %v467
        %558 = vst [vmem:[#allocation2 + $0xc8] sm:$0xff] %v472
        %559 = vst [vmem:[#allocation2 + $0xd0] sm:$0xff] %v477
        %560 = vst [vmem:[#allocation2 + $0xe8] sm:$0xff] %v482
        %561 = vst [vmem:[#allocation2 + $0xf0] sm:$0xff] %v487
        %562 = vst [vmem:[#allocation2 + $0x108] sm:$0xff] %v492
        %563 = vst [vmem:[#allocation2 + $0x110] sm:$0xff] %v497
        %564 = vst [vmem:[#allocation2 + $0x128] sm:$0xff] %v502
        %565 = vst [vmem:[#allocation2 + $0x130] sm:$0xff] %v507
        %v566 = vld [vmem:[#allocation8] sm:$0x1]
        %v567 = vld [vmem:[#allocation8 + $0x1] sm:$0x1]
        %v568 = vld [vmem:[#allocation8 + $0x2] sm:$0x1]
        %v569 = vld [vmem:[#allocation8 + $0x3] sm:$0x1]
        %v570 = vld [vmem:[#allocation8 + $0x4] sm:$0x1]
        %v571 = vld [vmem:[#allocation8 + $0x5] sm:$0x1]
        %v572 = vld [vmem:[#allocation8 + $0x6] sm:$0x1]
        %v573 = vld [vmem:[#allocation8 + $0x7] sm:$0x1]
        %v574 = vld [vmem:[#allocation8 + $0x8] sm:$0x1]
        %v575 = vld [vmem:[%s3] sm:$0x1]
        %v577 = vlaneseq
        %v578 = vshrl.u32 %v577, 7
        %v579 = vsub.s32 0, %v578
        %v580 = vrot.slane %v575, %v579
        %v582 = vld [vmem:[#allocation2 + $0x7] sm:$0xff]
        %v583 = vld [vmem:[#allocation2 + $0xf] sm:$0xff]
        %v584 = vld [vmem:[#allocation2 + $0x27] sm:$0xff]
        %v585 = vld [vmem:[#allocation2 + $0x2f] sm:$0xff]
        %v586 = vld [vmem:[#allocation2 + $0x47] sm:$0xff]
        %v587 = vld [vmem:[#allocation2 + $0x4f] sm:$0xff]
        %v588 = vld [vmem:[#allocation2 + $0x67] sm:$0xff]
        %v589 = vld [vmem:[#allocation2 + $0x6f] sm:$0xff]
        %v590 = vld [vmem:[#allocation2 + $0x87] sm:$0xff]
        %v591 = vld [vmem:[#allocation2 + $0x8f] sm:$0xff]
        %v592 = vld [vmem:[#allocation2 + $0xa7] sm:$0xff]
        %v593 = vld [vmem:[#allocation2 + $0xaf] sm:$0xff]
        %v594 = vld [vmem:[#allocation2 + $0xc7] sm:$0xff]
        %v595 = vld [vmem:[#allocation2 + $0xcf] sm:$0xff]
        %v596 = vld [vmem:[#allocation2 + $0xe7] sm:$0xff]
        %v597 = vld [vmem:[#allocation2 + $0xef] sm:$0xff]
        %v599 = vlaneseq
        %v600 = vshrl.u32 %v599, 7
        %v601 = vsub.s32 0, %v600
        %v602 = vrot.slane %v566, %v601
        %v604 = vmul.f32 %v582, %v602
        %v605 = vmul.f32 %v583, %v602
        %v606 = vmul.f32 %v584, %v602
        %v607 = vmul.f32 %v585, %v602
        %v608 = vmul.f32 %v586, %v602
        %v609 = vmul.f32 %v587, %v602
        %v610 = vmul.f32 %v588, %v602
        %v611 = vmul.f32 %v589, %v602
        %v612 = vmul.f32 %v590, %v602
        %v613 = vmul.f32 %v591, %v602
        %v614 = vmul.f32 %v592, %v602
        %v615 = vmul.f32 %v593, %v602
        %v616 = vmul.f32 %v594, %v602
        %v617 = vmul.f32 %v595, %v602
        %v618 = vmul.f32 %v596, %v602
        %v619 = vmul.f32 %v597, %v602
        %v620 = vadd.f32 %v580, %v604
        %v621 = vadd.f32 %v580, %v605
        %v622 = vadd.f32 %v580, %v606
        %v623 = vadd.f32 %v580, %v607
        %v624 = vadd.f32 %v580, %v608
        %v625 = vadd.f32 %v580, %v609
        %v626 = vadd.f32 %v580, %v610
        %v627 = vadd.f32 %v580, %v611
        %v628 = vadd.f32 %v580, %v612
        %v629 = vadd.f32 %v580, %v613
        %v630 = vadd.f32 %v580, %v614
        %v631 = vadd.f32 %v580, %v615
        %v632 = vadd.f32 %v580, %v616
        %v633 = vadd.f32 %v580, %v617
        %v634 = vadd.f32 %v580, %v618
        %v635 = vadd.f32 %v580, %v619
        %v636 = vld [vmem:[#allocation2 + $0x8] sm:$0xff]
        %v637 = vld [vmem:[#allocation2 + $0x10] sm:$0xff]
        %v638 = vld [vmem:[#allocation2 + $0x28] sm:$0xff]
        %v639 = vld [vmem:[#allocation2 + $0x30] sm:$0xff]
        %v640 = vld [vmem:[#allocation2 + $0x48] sm:$0xff]
        %v641 = vld [vmem:[#allocation2 + $0x50] sm:$0xff]
        %v642 = vld [vmem:[#allocation2 + $0x68] sm:$0xff]
        %v643 = vld [vmem:[#allocation2 + $0x70] sm:$0xff]
        %v644 = vld [vmem:[#allocation2 + $0x88] sm:$0xff]
        %v645 = vld [vmem:[#allocation2 + $0x90] sm:$0xff]
        %v646 = vld [vmem:[#allocation2 + $0xa8] sm:$0xff]
        %v647 = vld [vmem:[#allocation2 + $0xb0] sm:$0xff]
        %v648 = vld [vmem:[#allocation2 + $0xc8] sm:$0xff]
        %v649 = vld [vmem:[#allocation2 + $0xd0] sm:$0xff]
        %v650 = vld [vmem:[#allocation2 + $0xe8] sm:$0xff]
        %v651 = vld [vmem:[#allocation2 + $0xf0] sm:$0xff]
        %v653 = vlaneseq
        %v654 = vshrl.u32 %v653, 7
        %v655 = vsub.s32 0, %v654
        %v656 = vrot.slane %v567, %v655
        %v658 = vmul.f32 %v636, %v656
        %v659 = vmul.f32 %v637, %v656
        %v660 = vmul.f32 %v638, %v656
        %v661 = vmul.f32 %v639, %v656
        %v662 = vmul.f32 %v640, %v656
        %v663 = vmul.f32 %v641, %v656
        %v664 = vmul.f32 %v642, %v656
        %v665 = vmul.f32 %v643, %v656
        %v666 = vmul.f32 %v644, %v656
        %v667 = vmul.f32 %v645, %v656
        %v668 = vmul.f32 %v646, %v656
        %v669 = vmul.f32 %v647, %v656
        %v670 = vmul.f32 %v648, %v656
        %v671 = vmul.f32 %v649, %v656
        %v672 = vmul.f32 %v650, %v656
        %v673 = vmul.f32 %v651, %v656
        %v674 = vadd.f32 %v620, %v658
        %v675 = vadd.f32 %v621, %v659
        %v676 = vadd.f32 %v622, %v660
        %v677 = vadd.f32 %v623, %v661
        %v678 = vadd.f32 %v624, %v662
        %v679 = vadd.f32 %v625, %v663
        %v680 = vadd.f32 %v626, %v664
        %v681 = vadd.f32 %v627, %v665
        %v682 = vadd.f32 %v628, %v666
        %v683 = vadd.f32 %v629, %v667
        %v684 = vadd.f32 %v630, %v668
        %v685 = vadd.f32 %v631, %v669
        %v686 = vadd.f32 %v632, %v670
        %v687 = vadd.f32 %v633, %v671
        %v688 = vadd.f32 %v634, %v672
        %v689 = vadd.f32 %v635, %v673
        %v690 = vld [vmem:[#allocation2 + $0x9] sm:$0xff]
        %v691 = vld [vmem:[#allocation2 + $0x11] sm:$0xff]
        %v692 = vld [vmem:[#allocation2 + $0x29] sm:$0xff]
        %v693 = vld [vmem:[#allocation2 + $0x31] sm:$0xff]
        %v694 = vld [vmem:[#allocation2 + $0x49] sm:$0xff]
        %v695 = vld [vmem:[#allocation2 + $0x51] sm:$0xff]
        %v696 = vld [vmem:[#allocation2 + $0x69] sm:$0xff]
        %v697 = vld [vmem:[#allocation2 + $0x71] sm:$0xff]
        %v698 = vld [vmem:[#allocation2 + $0x89] sm:$0xff]
        %v699 = vld [vmem:[#allocation2 + $0x91] sm:$0xff]
        %v700 = vld [vmem:[#allocation2 + $0xa9] sm:$0xff]
        %v701 = vld [vmem:[#allocation2 + $0xb1] sm:$0xff]
        %v702 = vld [vmem:[#allocation2 + $0xc9] sm:$0xff]
        %v703 = vld [vmem:[#allocation2 + $0xd1] sm:$0xff]
        %v704 = vld [vmem:[#allocation2 + $0xe9] sm:$0xff]
        %v705 = vld [vmem:[#allocation2 + $0xf1] sm:$0xff]
        %v707 = vlaneseq
        %v708 = vshrl.u32 %v707, 7
        %v709 = vsub.s32 0, %v708
        %v710 = vrot.slane %v568, %v709
        %v712 = vmul.f32 %v690, %v710
        %v713 = vmul.f32 %v691, %v710
        %v714 = vmul.f32 %v692, %v710
        %v715 = vmul.f32 %v693, %v710
        %v716 = vmul.f32 %v694, %v710
        %v717 = vmul.f32 %v695, %v710
        %v718 = vmul.f32 %v696, %v710
        %v719 = vmul.f32 %v697, %v710
        %v720 = vmul.f32 %v698, %v710
        %v721 = vmul.f32 %v699, %v710
        %v722 = vmul.f32 %v700, %v710
        %v723 = vmul.f32 %v701, %v710
        %v724 = vmul.f32 %v702, %v710
        %v725 = vmul.f32 %v703, %v710
        %v726 = vmul.f32 %v704, %v710
        %v727 = vmul.f32 %v705, %v710
        %v728 = vadd.f32 %v674, %v712
        %v729 = vadd.f32 %v675, %v713
        %v730 = vadd.f32 %v676, %v714
        %v731 = vadd.f32 %v677, %v715
        %v732 = vadd.f32 %v678, %v716
        %v733 = vadd.f32 %v679, %v717
        %v734 = vadd.f32 %v680, %v718
        %v735 = vadd.f32 %v681, %v719
        %v736 = vadd.f32 %v682, %v720
        %v737 = vadd.f32 %v683, %v721
        %v738 = vadd.f32 %v684, %v722
        %v739 = vadd.f32 %v685, %v723
        %v740 = vadd.f32 %v686, %v724
        %v741 = vadd.f32 %v687, %v725
        %v742 = vadd.f32 %v688, %v726
        %v743 = vadd.f32 %v689, %v727
        %s744 = scalar_lea.vmem [#allocation2], 32
        %v745 = vld [vmem:[%s744 + $0x7] sm:$0xff]
        %v746 = vld [vmem:[%s744 + $0xf] sm:$0xff]
        %v747 = vld [vmem:[%s744 + $0x27] sm:$0xff]
        %v748 = vld [vmem:[%s744 + $0x2f] sm:$0xff]
        %v749 = vld [vmem:[%s744 + $0x47] sm:$0xff]
        %v750 = vld [vmem:[%s744 + $0x4f] sm:$0xff]
        %v751 = vld [vmem:[%s744 + $0x67] sm:$0xff]
        %v752 = vld [vmem:[%s744 + $0x6f] sm:$0xff]
        %v753 = vld [vmem:[%s744 + $0x87] sm:$0xff]
        %v754 = vld [vmem:[%s744 + $0x8f] sm:$0xff]
        %v755 = vld [vmem:[%s744 + $0xa7] sm:$0xff]
        %v756 = vld [vmem:[%s744 + $0xaf] sm:$0xff]
        %v757 = vld [vmem:[%s744 + $0xc7] sm:$0xff]
        %v758 = vld [vmem:[%s744 + $0xcf] sm:$0xff]
        %v759 = vld [vmem:[%s744 + $0xe7] sm:$0xff]
        %v760 = vld [vmem:[%s744 + $0xef] sm:$0xff]
        %v762 = vlaneseq
        %v763 = vshrl.u32 %v762, 7
        %v764 = vsub.s32 0, %v763
        %v765 = vrot.slane %v569, %v764
        %v767 = vmul.f32 %v745, %v765
        %v768 = vmul.f32 %v746, %v765
        %v769 = vmul.f32 %v747, %v765
        %v770 = vmul.f32 %v748, %v765
        %v771 = vmul.f32 %v749, %v765
        %v772 = vmul.f32 %v750, %v765
        %v773 = vmul.f32 %v751, %v765
        %v774 = vmul.f32 %v752, %v765
        %v775 = vmul.f32 %v753, %v765
        %v776 = vmul.f32 %v754, %v765
        %v777 = vmul.f32 %v755, %v765
        %v778 = vmul.f32 %v756, %v765
        %v779 = vmul.f32 %v757, %v765
        %v780 = vmul.f32 %v758, %v765
        %v781 = vmul.f32 %v759, %v765
        %v782 = vmul.f32 %v760, %v765
        %v783 = vadd.f32 %v728, %v767
        %v784 = vadd.f32 %v729, %v768
        %v785 = vadd.f32 %v730, %v769
        %v786 = vadd.f32 %v731, %v770
        %v787 = vadd.f32 %v732, %v771
        %v788 = vadd.f32 %v733, %v772
        %v789 = vadd.f32 %v734, %v773
        %v790 = vadd.f32 %v735, %v774
        %v791 = vadd.f32 %v736, %v775
        %v792 = vadd.f32 %v737, %v776
        %v793 = vadd.f32 %v738, %v777
        %v794 = vadd.f32 %v739, %v778
        %v795 = vadd.f32 %v740, %v779
        %v796 = vadd.f32 %v741, %v780
        %v797 = vadd.f32 %v742, %v781
        %v798 = vadd.f32 %v743, %v782
        %v799 = vld [vmem:[%s744 + $0x8] sm:$0xff]
        %v800 = vld [vmem:[%s744 + $0x10] sm:$0xff]
        %v801 = vld [vmem:[%s744 + $0x28] sm:$0xff]
        %v802 = vld [vmem:[%s744 + $0x30] sm:$0xff]
        %v803 = vld [vmem:[%s744 + $0x48] sm:$0xff]
        %v804 = vld [vmem:[%s744 + $0x50] sm:$0xff]
        %v805 = vld [vmem:[%s744 + $0x68] sm:$0xff]
        %v806 = vld [vmem:[%s744 + $0x70] sm:$0xff]
        %v807 = vld [vmem:[%s744 + $0x88] sm:$0xff]
        %v808 = vld [vmem:[%s744 + $0x90] sm:$0xff]
        %v809 = vld [vmem:[%s744 + $0xa8] sm:$0xff]
        %v810 = vld [vmem:[%s744 + $0xb0] sm:$0xff]
        %v811 = vld [vmem:[%s744 + $0xc8] sm:$0xff]
        %v812 = vld [vmem:[%s744 + $0xd0] sm:$0xff]
        %v813 = vld [vmem:[%s744 + $0xe8] sm:$0xff]
        %v814 = vld [vmem:[%s744 + $0xf0] sm:$0xff]
        %v816 = vlaneseq
        %v817 = vshrl.u32 %v816, 7
        %v818 = vsub.s32 0, %v817
        %v819 = vrot.slane %v570, %v818
        %v821 = vmul.f32 %v799, %v819
        %v822 = vmul.f32 %v800, %v819
        %v823 = vmul.f32 %v801, %v819
        %v824 = vmul.f32 %v802, %v819
        %v825 = vmul.f32 %v803, %v819
        %v826 = vmul.f32 %v804, %v819
        %v827 = vmul.f32 %v805, %v819
        %v828 = vmul.f32 %v806, %v819
        %v829 = vmul.f32 %v807, %v819
        %v830 = vmul.f32 %v808, %v819
        %v831 = vmul.f32 %v809, %v819
        %v832 = vmul.f32 %v810, %v819
        %v833 = vmul.f32 %v811, %v819
        %v834 = vmul.f32 %v812, %v819
        %v835 = vmul.f32 %v813, %v819
        %v836 = vmul.f32 %v814, %v819
        %v837 = vadd.f32 %v783, %v821
        %v838 = vadd.f32 %v784, %v822
        %v839 = vadd.f32 %v785, %v823
        %v840 = vadd.f32 %v786, %v824
        %v841 = vadd.f32 %v787, %v825
        %v842 = vadd.f32 %v788, %v826
        %v843 = vadd.f32 %v789, %v827
        %v844 = vadd.f32 %v790, %v828
        %v845 = vadd.f32 %v791, %v829
        %v846 = vadd.f32 %v792, %v830
        %v847 = vadd.f32 %v793, %v831
        %v848 = vadd.f32 %v794, %v832
        %v849 = vadd.f32 %v795, %v833
        %v850 = vadd.f32 %v796, %v834
        %v851 = vadd.f32 %v797, %v835
        %v852 = vadd.f32 %v798, %v836
        %v853 = vld [vmem:[%s744 + $0x9] sm:$0xff]
        %v854 = vld [vmem:[%s744 + $0x11] sm:$0xff]
        %v855 = vld [vmem:[%s744 + $0x29] sm:$0xff]
        %v856 = vld [vmem:[%s744 + $0x31] sm:$0xff]
        %v857 = vld [vmem:[%s744 + $0x49] sm:$0xff]
        %v858 = vld [vmem:[%s744 + $0x51] sm:$0xff]
        %v859 = vld [vmem:[%s744 + $0x69] sm:$0xff]
        %v860 = vld [vmem:[%s744 + $0x71] sm:$0xff]
        %v861 = vld [vmem:[%s744 + $0x89] sm:$0xff]
        %v862 = vld [vmem:[%s744 + $0x91] sm:$0xff]
        %v863 = vld [vmem:[%s744 + $0xa9] sm:$0xff]
        %v864 = vld [vmem:[%s744 + $0xb1] sm:$0xff]
        %v865 = vld [vmem:[%s744 + $0xc9] sm:$0xff]
        %v866 = vld [vmem:[%s744 + $0xd1] sm:$0xff]
        %v867 = vld [vmem:[%s744 + $0xe9] sm:$0xff]
        %v868 = vld [vmem:[%s744 + $0xf1] sm:$0xff]
        %v870 = vlaneseq
        %v871 = vshrl.u32 %v870, 7
        %v872 = vsub.s32 0, %v871
        %v873 = vrot.slane %v571, %v872
        %v875 = vmul.f32 %v853, %v873
        %v876 = vmul.f32 %v854, %v873
        %v877 = vmul.f32 %v855, %v873
        %v878 = vmul.f32 %v856, %v873
        %v879 = vmul.f32 %v857, %v873
        %v880 = vmul.f32 %v858, %v873
        %v881 = vmul.f32 %v859, %v873
        %v882 = vmul.f32 %v860, %v873
        %v883 = vmul.f32 %v861, %v873
        %v884 = vmul.f32 %v862, %v873
        %v885 = vmul.f32 %v863, %v873
        %v886 = vmul.f32 %v864, %v873
        %v887 = vmul.f32 %v865, %v873
        %v888 = vmul.f32 %v866, %v873
        %v889 = vmul.f32 %v867, %v873
        %v890 = vmul.f32 %v868, %v873
        %v891 = vadd.f32 %v837, %v875
        %v892 = vadd.f32 %v838, %v876
        %v893 = vadd.f32 %v839, %v877
        %v894 = vadd.f32 %v840, %v878
        %v895 = vadd.f32 %v841, %v879
        %v896 = vadd.f32 %v842, %v880
        %v897 = vadd.f32 %v843, %v881
        %v898 = vadd.f32 %v844, %v882
        %v899 = vadd.f32 %v845, %v883
        %v900 = vadd.f32 %v846, %v884
        %v901 = vadd.f32 %v847, %v885
        %v902 = vadd.f32 %v848, %v886
        %v903 = vadd.f32 %v849, %v887
        %v904 = vadd.f32 %v850, %v888
        %v905 = vadd.f32 %v851, %v889
        %v906 = vadd.f32 %v852, %v890
        %s907 = scalar_lea.vmem [#allocation2], 64
        %v908 = vld [vmem:[%s907 + $0x7] sm:$0xff]
        %v909 = vld [vmem:[%s907 + $0xf] sm:$0xff]
        %v910 = vld [vmem:[%s907 + $0x27] sm:$0xff]
        %v911 = vld [vmem:[%s907 + $0x2f] sm:$0xff]
        %v912 = vld [vmem:[%s907 + $0x47] sm:$0xff]
        %v913 = vld [vmem:[%s907 + $0x4f] sm:$0xff]
        %v914 = vld [vmem:[%s907 + $0x67] sm:$0xff]
        %v915 = vld [vmem:[%s907 + $0x6f] sm:$0xff]
        %v916 = vld [vmem:[%s907 + $0x87] sm:$0xff]
        %v917 = vld [vmem:[%s907 + $0x8f] sm:$0xff]
        %v918 = vld [vmem:[%s907 + $0xa7] sm:$0xff]
        %v919 = vld [vmem:[%s907 + $0xaf] sm:$0xff]
        %v920 = vld [vmem:[%s907 + $0xc7] sm:$0xff]
        %v921 = vld [vmem:[%s907 + $0xcf] sm:$0xff]
        %v922 = vld [vmem:[%s907 + $0xe7] sm:$0xff]
        %v923 = vld [vmem:[%s907 + $0xef] sm:$0xff]
        %v925 = vlaneseq
        %v926 = vshrl.u32 %v925, 7
        %v927 = vsub.s32 0, %v926
        %v928 = vrot.slane %v572, %v927
        %v930 = vmul.f32 %v908, %v928
        %v931 = vmul.f32 %v909, %v928
        %v932 = vmul.f32 %v910, %v928
        %v933 = vmul.f32 %v911, %v928
        %v934 = vmul.f32 %v912, %v928
        %v935 = vmul.f32 %v913, %v928
        %v936 = vmul.f32 %v914, %v928
        %v937 = vmul.f32 %v915, %v928
        %v938 = vmul.f32 %v916, %v928
        %v939 = vmul.f32 %v917, %v928
        %v940 = vmul.f32 %v918, %v928
        %v941 = vmul.f32 %v919, %v928
        %v942 = vmul.f32 %v920, %v928
        %v943 = vmul.f32 %v921, %v928
        %v944 = vmul.f32 %v922, %v928
        %v945 = vmul.f32 %v923, %v928
        %v946 = vadd.f32 %v891, %v930
        %v947 = vadd.f32 %v892, %v931
        %v948 = vadd.f32 %v893, %v932
        %v949 = vadd.f32 %v894, %v933
        %v950 = vadd.f32 %v895, %v934
        %v951 = vadd.f32 %v896, %v935
        %v952 = vadd.f32 %v897, %v936
        %v953 = vadd.f32 %v898, %v937
        %v954 = vadd.f32 %v899, %v938
        %v955 = vadd.f32 %v900, %v939
        %v956 = vadd.f32 %v901, %v940
        %v957 = vadd.f32 %v902, %v941
        %v958 = vadd.f32 %v903, %v942
        %v959 = vadd.f32 %v904, %v943
        %v960 = vadd.f32 %v905, %v944
        %v961 = vadd.f32 %v906, %v945
        %v962 = vld [vmem:[%s907 + $0x8] sm:$0xff]
        %v963 = vld [vmem:[%s907 + $0x10] sm:$0xff]
        %v964 = vld [vmem:[%s907 + $0x28] sm:$0xff]
        %v965 = vld [vmem:[%s907 + $0x30] sm:$0xff]
        %v966 = vld [vmem:[%s907 + $0x48] sm:$0xff]
        %v967 = vld [vmem:[%s907 + $0x50] sm:$0xff]
        %v968 = vld [vmem:[%s907 + $0x68] sm:$0xff]
        %v969 = vld [vmem:[%s907 + $0x70] sm:$0xff]
        %v970 = vld [vmem:[%s907 + $0x88] sm:$0xff]
        %v971 = vld [vmem:[%s907 + $0x90] sm:$0xff]
        %v972 = vld [vmem:[%s907 + $0xa8] sm:$0xff]
        %v973 = vld [vmem:[%s907 + $0xb0] sm:$0xff]
        %v974 = vld [vmem:[%s907 + $0xc8] sm:$0xff]
        %v975 = vld [vmem:[%s907 + $0xd0] sm:$0xff]
        %v976 = vld [vmem:[%s907 + $0xe8] sm:$0xff]
        %v977 = vld [vmem:[%s907 + $0xf0] sm:$0xff]
        %v979 = vlaneseq
        %v980 = vshrl.u32 %v979, 7
        %v981 = vsub.s32 0, %v980
        %v982 = vrot.slane %v573, %v981
        %v984 = vmul.f32 %v962, %v982
        %v985 = vmul.f32 %v963, %v982
        %v986 = vmul.f32 %v964, %v982
        %v987 = vmul.f32 %v965, %v982
        %v988 = vmul.f32 %v966, %v982
        %v989 = vmul.f32 %v967, %v982
        %v990 = vmul.f32 %v968, %v982
        %v991 = vmul.f32 %v969, %v982
        %v992 = vmul.f32 %v970, %v982
        %v993 = vmul.f32 %v971, %v982
        %v994 = vmul.f32 %v972, %v982
        %v995 = vmul.f32 %v973, %v982
        %v996 = vmul.f32 %v974, %v982
        %v997 = vmul.f32 %v975, %v982
        %v998 = vmul.f32 %v976, %v982
        %v999 = vmul.f32 %v977, %v982
        %v1000 = vadd.f32 %v946, %v984
        %v1001 = vadd.f32 %v947, %v985
        %v1002 = vadd.f32 %v948, %v986
        %v1003 = vadd.f32 %v949, %v987
        %v1004 = vadd.f32 %v950, %v988
        %v1005 = vadd.f32 %v951, %v989
        %v1006 = vadd.f32 %v952, %v990
        %v1007 = vadd.f32 %v953, %v991
        %v1008 = vadd.f32 %v954, %v992
        %v1009 = vadd.f32 %v955, %v993
        %v1010 = vadd.f32 %v956, %v994
        %v1011 = vadd.f32 %v957, %v995
        %v1012 = vadd.f32 %v958, %v996
        %v1013 = vadd.f32 %v959, %v997
        %v1014 = vadd.f32 %v960, %v998
        %v1015 = vadd.f32 %v961, %v999
        %v1016 = vld [vmem:[%s907 + $0x9] sm:$0xff]
        %v1017 = vld [vmem:[%s907 + $0x11] sm:$0xff]
        %v1018 = vld [vmem:[%s907 + $0x29] sm:$0xff]
        %v1019 = vld [vmem:[%s907 + $0x31] sm:$0xff]
        %v1020 = vld [vmem:[%s907 + $0x49] sm:$0xff]
        %v1021 = vld [vmem:[%s907 + $0x51] sm:$0xff]
        %v1022 = vld [vmem:[%s907 + $0x69] sm:$0xff]
        %v1023 = vld [vmem:[%s907 + $0x71] sm:$0xff]
        %v1024 = vld [vmem:[%s907 + $0x89] sm:$0xff]
        %v1025 = vld [vmem:[%s907 + $0x91] sm:$0xff]
        %v1026 = vld [vmem:[%s907 + $0xa9] sm:$0xff]
        %v1027 = vld [vmem:[%s907 + $0xb1] sm:$0xff]
        %v1028 = vld [vmem:[%s907 + $0xc9] sm:$0xff]
        %v1029 = vld [vmem:[%s907 + $0xd1] sm:$0xff]
        %v1030 = vld [vmem:[%s907 + $0xe9] sm:$0xff]
        %v1031 = vld [vmem:[%s907 + $0xf1] sm:$0xff]
        %v1033 = vlaneseq
        %v1034 = vshrl.u32 %v1033, 7
        %v1035 = vsub.s32 0, %v1034
        %v1036 = vrot.slane %v574, %v1035
        %v1038 = vmul.f32 %v1016, %v1036
        %v1039 = vmul.f32 %v1017, %v1036
        %v1040 = vmul.f32 %v1018, %v1036
        %v1041 = vmul.f32 %v1019, %v1036
        %v1042 = vmul.f32 %v1020, %v1036
        %v1043 = vmul.f32 %v1021, %v1036
        %v1044 = vmul.f32 %v1022, %v1036
        %v1045 = vmul.f32 %v1023, %v1036
        %v1046 = vmul.f32 %v1024, %v1036
        %v1047 = vmul.f32 %v1025, %v1036
        %v1048 = vmul.f32 %v1026, %v1036
        %v1049 = vmul.f32 %v1027, %v1036
        %v1050 = vmul.f32 %v1028, %v1036
        %v1051 = vmul.f32 %v1029, %v1036
        %v1052 = vmul.f32 %v1030, %v1036
        %v1053 = vmul.f32 %v1031, %v1036
        %v1054 = vadd.f32 %v1000, %v1038
        %v1055 = vadd.f32 %v1001, %v1039
        %v1056 = vadd.f32 %v1002, %v1040
        %v1057 = vadd.f32 %v1003, %v1041
        %v1058 = vadd.f32 %v1004, %v1042
        %v1059 = vadd.f32 %v1005, %v1043
        %v1060 = vadd.f32 %v1006, %v1044
        %v1061 = vadd.f32 %v1007, %v1045
        %v1062 = vadd.f32 %v1008, %v1046
        %v1063 = vadd.f32 %v1009, %v1047
        %v1064 = vadd.f32 %v1010, %v1048
        %v1065 = vadd.f32 %v1011, %v1049
        %v1066 = vadd.f32 %v1012, %v1050
        %v1067 = vadd.f32 %v1013, %v1051
        %v1068 = vadd.f32 %v1014, %v1052
        %v1069 = vadd.f32 %v1015, %v1053
        %1070 = vst [vmem:[%s304] sm:$0xff] %v1054
        %1071 = vst [vmem:[%s304 + $0x8] sm:$0xff] %v1055
        %1072 = vst [vmem:[%s304 + $0x10] sm:$0xff] %v1056
        %1073 = vst [vmem:[%s304 + $0x18] sm:$0xff] %v1057
        %1074 = vst [vmem:[%s304 + $0x20] sm:$0xff] %v1058
        %1075 = vst [vmem:[%s304 + $0x28] sm:$0xff] %v1059
        %1076 = vst [vmem:[%s304 + $0x30] sm:$0xff] %v1060
        %1077 = vst [vmem:[%s304 + $0x38] sm:$0xff] %v1061
        %1078 = vst [vmem:[%s304 + $0x40] sm:$0xff] %v1062
        %1079 = vst [vmem:[%s304 + $0x48] sm:$0xff] %v1063
        %1080 = vst [vmem:[%s304 + $0x50] sm:$0xff] %v1064
        %1081 = vst [vmem:[%s304 + $0x58] sm:$0xff] %v1065
        %1082 = vst [vmem:[%s304 + $0x60] sm:$0xff] %v1066
        %1083 = vst [vmem:[%s304 + $0x68] sm:$0xff] %v1067
        %1084 = vst [vmem:[%s304 + $0x70] sm:$0xff] %v1068
        %1085 = vst [vmem:[%s304 + $0x78] sm:$0xff] %v1069
        %s1086 = sand.u32 %s142, 1
        %s1087 = scalar_lea.sflag [#allocation5], %s1086
        %s1088 = sand.u32 %s142, 1
        %s1089 = smul.addr %s1088, 128
        %s1090 = scalar_lea.vmem [#allocation9], %s1089
        %s1091 = sand.u32 %s170, 1
        %s1092 = scalar_lea.sflag [#allocation11], %s1091
        %s1093 = sand.u32 %s170, 1
        %s1094 = smul.addr %s1093, 128
        %s1095 = scalar_lea.vmem [#allocation10], %s1094
        // Predicated region
        $region49: #{tpu_custom_call.1} parent=35 // pred_check
          %p1096 = pneg %p152
        $region50: #{tpu_custom_call.1} parent=35 // pred_check_branch
          %1098 = sbr.rel (%p1096) target = $region52
        $region51: #{tpu_custom_call.1} parent=35 // pred_region
          %s1099 = smul.u32 8, %s32
          %s1101 = ssub.s32 2048, 2048
          %1102 = vsyncadd %s1087, %s1101
          %s1103 = smul.addr %s1099, 2
          %s1104 = smul.addr %s31, 32
          %s1105 = sadd.s32 %s1103, %s1104
          %s1106 = smul.addr %s1105, 128
          %s1107 = scalar_lea.hbm %s4, %s1106
          %s1108 = sshll.u32 %s1090, 4
          %s1109 = int_to_ptr.vmem [resolvable:$true] %s1108
          %1114 = dma.vmem_to_hbm [thread:$0]  %s1109, 2048, %s1107, %s1087, 128, 128, 8
        $region52: #{tpu_custom_call.1} parent=35 // pred_fallthru
          _
        // Predicated region
        $region53: #{tpu_custom_call.1} parent=35 // pred_check
          %p1115 = pneg %p180
        $region54: #{tpu_custom_call.1} parent=35 // pred_check_branch
          %1117 = sbr.rel (%p1115) target = $region56
        $region55: #{tpu_custom_call.1} parent=35 // pred_region
          %s1118 = smul.u32 8, %s32
          %s1120 = ssub.s32 2048, 2048
          %1121 = vsyncadd %s1092, %s1120
          %s1122 = smul.addr %s1118, 2
          %s1123 = smul.addr %s31, 32
          %s1124 = sadd.s32 %s1122, %s1123
          %s1125 = smul.addr %s1124, 128
          %s1126 = scalar_lea.hbm %s5, %s1125
          %s1127 = sshll.u32 %s1095, 4
          %s1128 = int_to_ptr.vmem [resolvable:$true] %s1127
          %1133 = dma.vmem_to_hbm [thread:$0]  %s1128, 2048, %s1126, %s1092, 128, 128, 8
        $region56: #{tpu_custom_call.1} parent=35 // pred_fallthru
          _
      $region36: #{tpu_custom_call.1} parent=5 // pred_fallthru
        _
      %p1134 = scmp.le.s32.totalorder 2, %s22
      // Predicated region
      $region57: #{tpu_custom_call.1} parent=5 // pred_check
        %p1135 = pneg %p1134
      $region58: #{tpu_custom_call.1} parent=5 // pred_check_branch
        %1137 = sbr.rel (%p1135) target = $region60
      $region59: #{tpu_custom_call.1} parent=5 // pred_region
        %s1138 = ssub.s32 %s22, 2
        // Predicated region
        $region61: #{tpu_custom_call.1} parent=59 // pred_check
          %p1139 = pneg %p158
        $region62: #{tpu_custom_call.1} parent=59 // pred_check_branch
          %1141 = sbr.rel (%p1139) target = $region64
        $region63: #{tpu_custom_call.1} parent=59 // pred_region
          %s1142 = sand.u32 %s143, 1
          %s1143 = scalar_lea.sflag [#allocation5], %s1142
          %s1144 = sand.u32 %s143, 1
          %s1145 = smul.addr %s1144, 128
          %s1146 = scalar_lea.vmem [#allocation9], %s1145
          %1147 = dma.done %s1143, 2048
        $region64: #{tpu_custom_call.1} parent=59 // pred_fallthru
          _
        // Predicated region
        $region65: #{tpu_custom_call.1} parent=59 // pred_check
          %p1148 = pneg %p186
        $region66: #{tpu_custom_call.1} parent=59 // pred_check_branch
          %1150 = sbr.rel (%p1148) target = $region68
        $region67: #{tpu_custom_call.1} parent=59 // pred_region
          %s1151 = sand.u32 %s171, 1
          %s1152 = scalar_lea.sflag [#allocation11], %s1151
          %s1153 = sand.u32 %s171, 1
          %s1154 = smul.addr %s1153, 128
          %s1155 = scalar_lea.vmem [#allocation10], %s1154
          %1156 = dma.done %s1152, 2048
        $region68: #{tpu_custom_call.1} parent=59 // pred_fallthru
          _
      $region60: #{tpu_custom_call.1} parent=5 // pred_fallthru
        _
    $region6: #{tpu_custom_call.1} parent=1 // loop_footer
      %s26 = sadd.s32 1, %s22
    $region7: #{tpu_custom_call.1} parent=1 // loop_footer_branch
      %21 = sbr.rel target = $region3
    $region8: #{tpu_custom_call.1} parent=1 // loop_exit
      _
    %1157 = vsyncpa [#allocation4], 1
    %s1158 = scalar_lea.sflag [#allocation4], 1
    %1159 = vsyncpa %s1158, 1
    %1160 = vsyncpa [#allocation7], 1
    %1161 = vsyncpa [#allocation5], 1
    %s1162 = scalar_lea.sflag [#allocation5], 1
    %1163 = vsyncpa %s1162, 1
    %1164 = vsyncpa [#allocation11], 1
    %s1165 = scalar_lea.sflag [#allocation11], 1
    %1166 = vsyncpa %s1165, 1

</llo_original>
